<compile_context>
chip_gen: v7x
topology: tpu7x:2x2x1
jax: 0.10.0
libtpu: 0.0.40
codegen_flags: <defaults>
</compile_context>

<pallas_src>
import functools

import jax
import jax.numpy as jnp
from jax.experimental import pallas as pl
from jax.experimental.pallas import tpu as pltpu

_NEG_LOGIT = -1e9  # pad-column logit bias -> exp() underflows to 0 in softmax


def _round_up(n: int, m: int) -> int:
    return (n + m - 1) // m * m


def _cdiv(a: int, b: int) -> int:
    return -(-a // b)


# --------------------------------------------------------------------------
# Kernel: fused 3-layer MLP + softmax on one (TM, *) batch tile.
# Weights / biases use constant index maps so they are resident across steps.
# --------------------------------------------------------------------------
def actor_kernel(x_ref, w1_ref, b1_ref, w2_ref, b2_ref, w3_ref, b3_ref, out_ref):
    x = x_ref[...]  # already bf16 (cast in the wrapper)

    # fc1 + relu   (bf16 MXU operands, f32 accumulation; fused bias+relu+cast)
    h1 = jnp.dot(x, w1_ref[...], preferred_element_type=jnp.float32) + b1_ref[...]
    h1 = jnp.maximum(h1, 0.0).astype(jnp.bfloat16)

    # fc2 + relu
    h2 = jnp.dot(h1, w2_ref[...], preferred_element_type=jnp.float32) + b2_ref[...]
    h2 = jnp.maximum(h2, 0.0).astype(jnp.bfloat16)

    # fc3 (action dim padded to a lane multiple; pad columns carry -1e9 bias)
    logits = jnp.dot(h2, w3_ref[...], preferred_element_type=jnp.float32) + b3_ref[...]

    # numerically stable softmax over the last dim; pad columns -> exp ~ 0
    m = jnp.max(logits, axis=-1, keepdims=True)
    e = jnp.exp(logits - m)
    denom = jnp.sum(e, axis=-1, keepdims=True)
    out_ref[...] = (e * pl.reciprocal(denom, approx=True)).astype(out_ref.dtype)


# --------------------------------------------------------------------------
# Param preparation: cast weights to bf16 and pad the action dim to 128 lanes
# (done once, not per forward call). num_actions stays a plain Python int.
# --------------------------------------------------------------------------
def prepare_actor_params(params):
    w3 = params["w3"]
    b3 = params["b3"]
    num_actions = int(w3.shape[1])
    a_pad = _round_up(max(num_actions, 128), 128)
    if a_pad != num_actions:
        w3 = jnp.pad(w3, ((0, 0), (0, a_pad - num_actions)))
        b3 = jnp.pad(b3, ((0, 0), (0, a_pad - num_actions)),
                     constant_values=_NEG_LOGIT)
    return {
        "w1": params["w1"].astype(jnp.bfloat16),
        "b1": params["b1"].astype(jnp.float32),
        "w2": params["w2"].astype(jnp.bfloat16),
        "b2": params["b2"].astype(jnp.float32),
        "w3": w3.astype(jnp.bfloat16),
        "b3": b3.astype(jnp.float32),   # keep f32: -1e9 pad logit lives here
        "num_actions": num_actions,     # Python int, never traced
    }


# --------------------------------------------------------------------------
# Tiling: fewest grid steps possible (step overhead dominates this kernel).
# Small batch -> 1 step; large batch -> smallest even n_steps (>=2) so the
# "parallel" batch axis can shard across both TensorCores on v7x, with the
# tile rounded up to 16 rows (bf16 sublane packing) and capped at max_tile.
# --------------------------------------------------------------------------
def _choose_tiling(batch: int, max_tile: int):
    if batch <= min(256, max_tile):
        return _round_up(max(batch, 16), 16), 1
    n_steps = 2
    while _round_up(_cdiv(batch, n_steps), 16) > max_tile:
        n_steps += 2
    return _round_up(_cdiv(batch, n_steps), 16), n_steps


# --------------------------------------------------------------------------
# Forward wrapper: batch-tiled pallas_call.
# --------------------------------------------------------------------------
@functools.partial(jax.jit,
                   static_argnames=("num_actions", "max_tile", "out_dtype"))
def _actor_forward(x, w1, b1, w2, b2, w3, b3, *,
                   num_actions, max_tile=2048, out_dtype=jnp.bfloat16):
    batch, num_inputs = x.shape
    hidden = w1.shape[1]
    a_pad = w3.shape[1]

    tile_m, n_steps = _choose_tiling(batch, max_tile)
    b_pad = tile_m * n_steps

    # bf16 x in the wrapper: halves the per-step x DMA and removes an
    # in-kernel VPU cast (matters most on v5e, no bf16 VALU there).
    x = x.astype(jnp.bfloat16)
    if b_pad != batch:
        x = jnp.pad(x, ((0, b_pad - batch), (0, 0)))

    const = lambda a: pl.BlockSpec(a.shape, lambda i: (0, 0))

    itemsize = jnp.dtype(out_dtype).itemsize
    cost = pl.CostEstimate(
        flops=2 * b_pad * (num_inputs * hidden + hidden * hidden + hidden * a_pad),
        transcendentals=b_pad * a_pad,
        bytes_accessed=(b_pad * num_inputs * 2                                   # x (bf16)
                        + 2 * (num_inputs * hidden + hidden * hidden
                               + hidden * a_pad)                                 # weights (bf16)
                        + 4 * (2 * hidden + a_pad)                               # biases (f32)
                        + b_pad * a_pad * itemsize),                             # output
    )

    out = pl.pallas_call(
        actor_kernel,
        out_shape=jax.ShapeDtypeStruct((b_pad, a_pad), out_dtype),
        grid=(n_steps,),
        in_specs=[
            pl.BlockSpec((tile_m, num_inputs), lambda i: (i, 0)),  # x tile
            const(w1), const(b1),
            const(w2), const(b2),
            const(w3), const(b3),
        ],
        out_specs=pl.BlockSpec((tile_m, a_pad), lambda i: (i, 0)),
        compiler_params=pltpu.CompilerParams(
            dimension_semantics=("parallel",)),
        cost_estimate=cost,
    )(x, w1, b1, w2, b2, w3, b3)

    # Static slice back to the logical (batch, num_actions) shape.
    # (Keep the padded layout downstream instead if the consumer allows it.)
    return out[:batch, :num_actions]


def actor_forward(x, prep, *, max_tile=2048, out_dtype=jnp.bfloat16):
    return _actor_forward(
        x, prep["w1"], prep["b1"], prep["w2"], prep["b2"], prep["w3"], prep["b3"],
        num_actions=prep["num_actions"], max_tile=max_tile, out_dtype=out_dtype)


# --------------------------------------------------------------------------
# Init mimicking PyTorch nn.Linear (uniform +/- 1/sqrt(fan_in)); weights are
# stored as (in_features, out_features) so the kernel runs y = x @ W + b.
# --------------------------------------------------------------------------
def init_actor_params(key, num_inputs, num_actions, hidden_size):
    ks = jax.random.split(key, 6)

    def lin(kw, kb, fan_in, fan_out):
        bound = 1.0 / jnp.sqrt(jnp.float32(fan_in))
        w = jax.random.uniform(kw, (fan_in, fan_out), jnp.float32, -bound, bound)
        b = jax.random.uniform(kb, (1, fan_out), jnp.float32, -bound, bound)
        return w, b

    w1, b1 = lin(ks[0], ks[1], num_inputs, hidden_size)
    w2, b2 = lin(ks[2], ks[3], hidden_size, hidden_size)
    w3, b3 = lin(ks[4], ks[5], hidden_size, num_actions)
    return {"w1": w1, "b1": b1, "w2": w2, "b2": b2, "w3": w3, "b3": b3}


if __name__ == "__main__":
    key = jax.random.PRNGKey(0)
    k_x, k_p = jax.random.split(key)

    batch = 512          # exercises the 2-step grid (2 x 256 rows)
    num_inputs = 16
    num_actions = 8
    hidden_size = 256    # module default

    x = jax.random.normal(k_x, (batch, num_inputs), jnp.float32)
    params = init_actor_params(k_p, num_inputs, num_actions, hidden_size)
    prep = prepare_actor_params(params)

    out = jax.block_until_ready(actor_forward(x, prep))
    assert out.shape == (batch, num_actions)

    # precision-matched pure-JAX reference (bf16 matmuls, f32 accumulation)
    def ref_forward(x, params):
        xb = x.astype(jnp.bfloat16)
        h1 = jnp.maximum(
            jnp.dot(xb, params["w1"].astype(jnp.bfloat16),
                    preferred_element_type=jnp.float32) + params["b1"], 0.0)
        h2 = jnp.maximum(
            jnp.dot(h1.astype(jnp.bfloat16), params["w2"].astype(jnp.bfloat16),
                    preferred_element_type=jnp.float32) + params["b2"], 0.0)
        logits = jnp.dot(h2.astype(jnp.bfloat16), params["w3"].astype(jnp.bfloat16),
                         preferred_element_type=jnp.float32) + params["b3"]
        return jax.nn.softmax(logits, axis=-1)

    ref = ref_forward(x, params)
    out_f32 = out.astype(jnp.float32)
    # bf16 output + approx reciprocal -> ~1e-3 relative error; 1e-2 abs tol.
    assert jnp.allclose(jnp.sum(out_f32, axis=-1), 1.0, atol=1e-2), "rows must sum to 1"
    assert jnp.allclose(out_f32, ref, atol=1e-2), "mismatch vs. matched JAX reference"

    # ragged small batch -> single-step grid path
    x_small = jax.random.normal(k_x, (37, num_inputs), jnp.float32)
    out_small = jax.block_until_ready(actor_forward(x_small, prep))
    assert out_small.shape == (37, num_actions)
    assert jnp.allclose(jnp.sum(out_small.astype(jnp.float32), axis=-1), 1.0, atol=1e-2)
    assert jnp.allclose(out_small.astype(jnp.float32), ref_forward(x_small, params),
                        atol=1e-2)

    print("KERNEL_OK")
</pallas_src>

<mosaic_0001>
module attributes {stable_mosaic.version = 11 : i64} {
  func.func @actor_kernel(%arg0: i32, %arg1: memref<256x16xbf16, #tpu.memory_space<vmem>>, %arg2: memref<16x256xbf16, #tpu.memory_space<vmem>>, %arg3: memref<1x256xf32, #tpu.memory_space<vmem>>, %arg4: memref<256x256xbf16, #tpu.memory_space<vmem>>, %arg5: memref<1x256xf32, #tpu.memory_space<vmem>>, %arg6: memref<256x128xbf16, #tpu.memory_space<vmem>>, %arg7: memref<1x128xf32, #tpu.memory_space<vmem>>, %arg8: memref<256x128xbf16, #tpu.memory_space<vmem>>) attributes {dimension_semantics = [#tpu.dimension_semantics<parallel>], iteration_bounds = array<i64: 2>, scalar_prefetch = 0 : i64, scratch_operands = 0 : i64, tpu.core_type = #tpu.core_type<tc>, window_params = [{transform_indices = @transform_0, window_bounds = array<i64: 256, 16>}, {pipeline_mode = #tpu.pipeline_mode<synchronous>, transform_indices = @transform_1, window_bounds = array<i64: 16, 256>}, {pipeline_mode = #tpu.pipeline_mode<synchronous>, transform_indices = @transform_2, window_bounds = array<i64: 1, 256>}, {pipeline_mode = #tpu.pipeline_mode<synchronous>, transform_indices = @transform_3, window_bounds = array<i64: 256, 256>}, {pipeline_mode = #tpu.pipeline_mode<synchronous>, transform_indices = @transform_4, window_bounds = array<i64: 1, 256>}, {pipeline_mode = #tpu.pipeline_mode<synchronous>, transform_indices = @transform_5, window_bounds = array<i64: 256, 128>}, {pipeline_mode = #tpu.pipeline_mode<synchronous>, transform_indices = @transform_6, window_bounds = array<i64: 1, 128>}, {transform_indices = @transform_7, window_bounds = array<i64: 256, 128>}]} {
    %c0 = arith.constant 0 : index
    %c0_0 = arith.constant 0 : index
    %0 = vector.load %arg1[%c0, %c0_0] : memref<256x16xbf16, #tpu.memory_space<vmem>>, vector<256x16xbf16>
    %c0_1 = arith.constant 0 : index
    %c0_2 = arith.constant 0 : index
    %1 = vector.load %arg2[%c0_1, %c0_2] : memref<16x256xbf16, #tpu.memory_space<vmem>>, vector<16x256xbf16>
    %cst = arith.constant dense<0.000000e+00> : vector<256x256xf32>
    %2 = tpu.matmul %0, %1, %cst {dimension_numbers = #tpu.dot_dimension_numbers<[1], [0], [0], [1], [0, 0, 1, 1], [], []>} : vector<256x16xbf16>, vector<16x256xbf16>, vector<256x256xf32> -> vector<256x256xf32>
    %c0_3 = arith.constant 0 : index
    %c0_4 = arith.constant 0 : index
    %3 = vector.load %arg3[%c0_3, %c0_4] : memref<1x256xf32, #tpu.memory_space<vmem>>, vector<1x256xf32>
    %4 = vector.broadcast %3 : vector<1x256xf32> to vector<256x256xf32>
    %5 = arith.addf %2, %4 : vector<256x256xf32>
    %cst_5 = arith.constant 0.000000e+00 : f32
    %6 = vector.broadcast %cst_5 : f32 to vector<256x256xf32>
    %7 = arith.maximumf %5, %6 : vector<256x256xf32>
    %8 = arith.truncf %7 : vector<256x256xf32> to vector<256x256xbf16>
    %c0_6 = arith.constant 0 : index
    %c0_7 = arith.constant 0 : index
    %9 = vector.load %arg4[%c0_6, %c0_7] : memref<256x256xbf16, #tpu.memory_space<vmem>>, vector<256x256xbf16>
    %cst_8 = arith.constant dense<0.000000e+00> : vector<256x256xf32>
    %10 = tpu.matmul %8, %9, %cst_8 {dimension_numbers = #tpu.dot_dimension_numbers<[1], [0], [0], [1], [0, 0, 1, 1], [], []>} : vector<256x256xbf16>, vector<256x256xbf16>, vector<256x256xf32> -> vector<256x256xf32>
    %c0_9 = arith.constant 0 : index
    %c0_10 = arith.constant 0 : index
    %11 = vector.load %arg5[%c0_9, %c0_10] : memref<1x256xf32, #tpu.memory_space<vmem>>, vector<1x256xf32>
    %12 = vector.broadcast %11 : vector<1x256xf32> to vector<256x256xf32>
    %13 = arith.addf %10, %12 : vector<256x256xf32>
    %cst_11 = arith.constant 0.000000e+00 : f32
    %14 = vector.broadcast %cst_11 : f32 to vector<256x256xf32>
    %15 = arith.maximumf %13, %14 : vector<256x256xf32>
    %16 = arith.truncf %15 : vector<256x256xf32> to vector<256x256xbf16>
    %c0_12 = arith.constant 0 : index
    %c0_13 = arith.constant 0 : index
    %17 = vector.load %arg6[%c0_12, %c0_13] : memref<256x128xbf16, #tpu.memory_space<vmem>>, vector<256x128xbf16>
    %cst_14 = arith.constant dense<0.000000e+00> : vector<256x128xf32>
    %18 = tpu.matmul %16, %17, %cst_14 {dimension_numbers = #tpu.dot_dimension_numbers<[1], [0], [0], [1], [0, 0, 1, 1], [], []>} : vector<256x256xbf16>, vector<256x128xbf16>, vector<256x128xf32> -> vector<256x128xf32>
    %c0_15 = arith.constant 0 : index
    %c0_16 = arith.constant 0 : index
    %19 = vector.load %arg7[%c0_15, %c0_16] : memref<1x128xf32, #tpu.memory_space<vmem>>, vector<1x128xf32>
    %20 = vector.broadcast %19 : vector<1x128xf32> to vector<256x128xf32>
    %21 = arith.addf %18, %20 : vector<256x128xf32>
    %cst_17 = arith.constant dense<0xFF800000> : vector<256xf32>
    %22 = vector.multi_reduction <maximumf>, %21, %cst_17 [1] : vector<256x128xf32> to vector<256xf32>
    %23 = vector.shape_cast %22 : vector<256xf32> to vector<256x1xf32>
    %24 = vector.broadcast %23 : vector<256x1xf32> to vector<256x128xf32>
    %25 = arith.subf %21, %24 : vector<256x128xf32>
    %26 = math.exp %25 : vector<256x128xf32>
    %cst_18 = arith.constant dense<0.000000e+00> : vector<256xf32>
    %27 = vector.multi_reduction <add>, %26, %cst_18 [1] : vector<256x128xf32> to vector<256xf32>
    %28 = vector.shape_cast %27 : vector<256xf32> to vector<256x1xf32>
    %29 = tpu.reciprocal %28 {approx = true} : vector<256x1xf32> -> vector<256x1xf32>
    %30 = vector.broadcast %29 : vector<256x1xf32> to vector<256x128xf32>
    %31 = arith.mulf %26, %30 : vector<256x128xf32>
    %32 = arith.truncf %31 : vector<256x128xf32> to vector<256x128xbf16>
    %c0_19 = arith.constant 0 : index
    %c0_20 = arith.constant 0 : index
    %33 = vector.load %arg8[%c0_19, %c0_20] : memref<256x128xbf16, #tpu.memory_space<vmem>>, vector<256x128xbf16>
    tpu.vector_store %arg8[%c0_19, %c0_20], %32 {strides = array<i32>} : memref<256x128xbf16, #tpu.memory_space<vmem>>, vector<256x128xbf16>,
    return
  }
  func.func @transform_0(%arg0: i32) -> (i32, i32) {
    %c0_i32 = arith.constant 0 : i32
    %c0_i32_0 = arith.constant 0 : i32
    return %arg0, %c0_i32 : i32, i32
  }
  func.func @transform_1(%arg0: i32) -> (i32, i32) {
    %c0_i32 = arith.constant 0 : i32
    %c0_i32_0 = arith.constant 0 : i32
    %c0_i32_1 = arith.constant 0 : i32
    return %c0_i32, %c0_i32_0 : i32, i32
  }
  func.func @transform_2(%arg0: i32) -> (i32, i32) {
    %c0_i32 = arith.constant 0 : i32
    %c0_i32_0 = arith.constant 0 : i32
    %c0_i32_1 = arith.constant 0 : i32
    return %c0_i32, %c0_i32_0 : i32, i32
  }
  func.func @transform_3(%arg0: i32) -> (i32, i32) {
    %c0_i32 = arith.constant 0 : i32
    %c0_i32_0 = arith.constant 0 : i32
    %c0_i32_1 = arith.constant 0 : i32
    return %c0_i32, %c0_i32_0 : i32, i32
  }
  func.func @transform_4(%arg0: i32) -> (i32, i32) {
    %c0_i32 = arith.constant 0 : i32
    %c0_i32_0 = arith.constant 0 : i32
    %c0_i32_1 = arith.constant 0 : i32
    return %c0_i32, %c0_i32_0 : i32, i32
  }
  func.func @transform_5(%arg0: i32) -> (i32, i32) {
    %c0_i32 = arith.constant 0 : i32
    %c0_i32_0 = arith.constant 0 : i32
    %c0_i32_1 = arith.constant 0 : i32
    return %c0_i32, %c0_i32_0 : i32, i32
  }
  func.func @transform_6(%arg0: i32) -> (i32, i32) {
    %c0_i32 = arith.constant 0 : i32
    %c0_i32_0 = arith.constant 0 : i32
    %c0_i32_1 = arith.constant 0 : i32
    return %c0_i32, %c0_i32_0 : i32, i32
  }
  func.func @transform_7(%arg0: i32) -> (i32, i32) {
    %c0_i32 = arith.constant 0 : i32
    %c0_i32_0 = arith.constant 0 : i32
    return %arg0, %c0_i32 : i32, i32
  }
}

</mosaic_0001>

<llo_original>
// kernel: _actor_forward.1
$region0: #{_actor_forward.1}
  #allocation0 [shape = 'u32[]', space=smem, size = 0x4, offset = 0x4, fixed_abs, tag = 'smem constant byte address 0x4 - core index']
  #allocation1 [shape = 'u32[144,128]{1,0:T(1,128)}', space=vmem, size = 0x12000, scoped, tag = 'internal scratch']
  %s0 = inlined_call_operand.vmem [shape: bf16[512,16], index: 0, kind: input, shape index: {}]
  %s1 = inlined_call_operand.hbm [shape: bf16[16,256], index: 1, kind: input, shape index: {}]
  %s2 = inlined_call_operand.vmem [shape: f32[1,256], index: 2, kind: input, shape index: {}]
  %s3 = inlined_call_operand.vmem [shape: bf16[256,256], index: 3, kind: input, shape index: {}]
  %s4 = inlined_call_operand.vmem [shape: f32[1,256], index: 4, kind: input, shape index: {}]
  %s5 = inlined_call_operand.vmem [shape: bf16[256,128], index: 5, kind: input, shape index: {}]
  %s6 = inlined_call_operand.vmem [shape: f32[1,128], index: 6, kind: input, shape index: {}]
  %s7 = inlined_call_operand.vmem [shape: bf16[512,128], index: 7, kind: output, shape index: {}]
  %s8 = sld [smem:[#allocation0]]
  $region65: #{_actor_forward.1} parent=0
    _
  %s10 = ssub.s32 1, %s8
  %s11 = scalar_select 0, %s10, %s8
  $region1: #{_actor_forward.1} parent=0
    #allocation2 [shape = 'u8[8192]{0}', space=vmem, size = 0x2000, scoped, tag = 'input window, operand 1, single buffered']
    #allocation3 [shape = 's32[2]{0}', space=sflag, size = 0x8, scoped, tag = 'scoped memory for _actor_forward.1']
    %12 = vsyncpa [#allocation3], 0
    loop: start=0, step=1, limit=4
    $region2: #{_actor_forward.1} parent=1 // loop_pre_header
      _
    $region3: #{_actor_forward.1} parent=1 // loop_header
      %s14 = sphi 0, %s18
      %p15 = scmp.ge.s32.totalorder %s14, 4
      %s24 = sphi 0, %s26
      %s27 = sphi 0, %s24
      %s28 = sphi 0, %s27
      %s44 = sphi 0, %s28
      %s48 = sphi 0, %s48
      %s50 = sphi 0, %s48
      %s51 = sphi 0, %s50
      %s65 = sphi 0, %s51
      %s69 = sphi 0, %s69
      %s71 = sphi 0, %s69
      %s72 = sphi 0, %s71
      %s86 = sphi 0, %s72
      %s90 = sphi 0, %s90
      %s92 = sphi 0, %s90
      %s93 = sphi 0, %s92
      %s107 = sphi 0, %s93
      %s111 = sphi 0, %s111
      %s113 = sphi 0, %s111
      %s114 = sphi 0, %s113
      %s128 = sphi 0, %s114
      %s132 = sphi 0, %s132
      %s134 = sphi 0, %s132
      %s135 = sphi 0, %s134
      %s149 = sphi 0, %s135
      %s153 = sphi 0, %s153
      %s155 = sphi 0, %s153
      %s156 = sphi 0, %s155
      %s170 = sphi 0, %s156
      %s176 = sphi 0, %s178
      %s179 = sphi 0, %s176
      %s180 = sphi 0, %s179
      %s196 = sphi 0, %s180
    $region4: #{_actor_forward.1} parent=1 // loop_header_branch
      %17 = sbr.rel (%p15) target = $region8
    $region5: #{_actor_forward.1} parent=1 // loop_body
      %s19 = ssub.s32 %s14, 1
      %s20 = ssub.s32 %s14, 2
      %s21 = sadd.s32 %s14, 1
      %s22 = ssub.s32 %s14, %s21
      %p23 = scmp.eq.s32.totalorder %s22, 0
      %s25 = sadd.s32 %s24, 1
      %s26 = scalar_select %p23, %s24, %s25
      %p29 = pneg %p23
      %p30 = scmp.eq.s32.totalorder %s14, 1
      %p31 = por %p29, %p30
      %p32 = scmp.ne.s32.totalorder %s24, %s27
      %p33 = scmp.eq.s32.totalorder %s14, 0
      %p34 = por %p32, %p33
      %p35 = scmp.ne.s32.totalorder %s24, %s27
      %p36 = scmp.eq.s32.totalorder %s19, 1
      %p37 = por %p35, %p36
      %p38 = scmp.ne.s32.totalorder %s27, %s28
      %p39 = scmp.eq.s32.totalorder %s19, 0
      %p40 = por %p38, %p39
      %p41 = scmp.ne.s32.totalorder %s27, %s28
      %p42 = scmp.eq.s32.totalorder %s20, 1
      %p43 = por %p41, %p42
      %p45 = scmp.ne.s32.totalorder %s28, %s44
      %p46 = scmp.eq.s32.totalorder %s20, 0
      %p47 = por %p45, %p46
      %s49 = sadd.s32 %s48, 1
      %p52 = scmp.eq.s32.totalorder %s14, 1
      %p53 = scmp.ne.s32.totalorder %s48, %s50
      %p54 = scmp.eq.s32.totalorder %s14, 0
      %p55 = por %p53, %p54
      %p56 = scmp.ne.s32.totalorder %s48, %s50
      %p57 = scmp.eq.s32.totalorder %s19, 1
      %p58 = por %p56, %p57
      %p59 = scmp.ne.s32.totalorder %s50, %s51
      %p60 = scmp.eq.s32.totalorder %s19, 0
      %p61 = por %p59, %p60
      %p62 = scmp.ne.s32.totalorder %s50, %s51
      %p63 = scmp.eq.s32.totalorder %s20, 1
      %p64 = por %p62, %p63
      %p66 = scmp.ne.s32.totalorder %s51, %s65
      %p67 = scmp.eq.s32.totalorder %s20, 0
      %p68 = por %p66, %p67
      %s70 = sadd.s32 %s69, 1
      %p73 = scmp.eq.s32.totalorder %s14, 1
      %p74 = scmp.ne.s32.totalorder %s69, %s71
      %p75 = scmp.eq.s32.totalorder %s14, 0
      %p76 = por %p74, %p75
      %p77 = scmp.ne.s32.totalorder %s69, %s71
      %p78 = scmp.eq.s32.totalorder %s19, 1
      %p79 = por %p77, %p78
      %p80 = scmp.ne.s32.totalorder %s71, %s72
      %p81 = scmp.eq.s32.totalorder %s19, 0
      %p82 = por %p80, %p81
      %p83 = scmp.ne.s32.totalorder %s71, %s72
      %p84 = scmp.eq.s32.totalorder %s20, 1
      %p85 = por %p83, %p84
      %p87 = scmp.ne.s32.totalorder %s72, %s86
      %p88 = scmp.eq.s32.totalorder %s20, 0
      %p89 = por %p87, %p88
      %s91 = sadd.s32 %s90, 1
      %p94 = scmp.eq.s32.totalorder %s14, 1
      %p95 = scmp.ne.s32.totalorder %s90, %s92
      %p96 = scmp.eq.s32.totalorder %s14, 0
      %p97 = por %p95, %p96
      %p98 = scmp.ne.s32.totalorder %s90, %s92
      %p99 = scmp.eq.s32.totalorder %s19, 1
      %p100 = por %p98, %p99
      %p101 = scmp.ne.s32.totalorder %s92, %s93
      %p102 = scmp.eq.s32.totalorder %s19, 0
      %p103 = por %p101, %p102
      %p104 = scmp.ne.s32.totalorder %s92, %s93
      %p105 = scmp.eq.s32.totalorder %s20, 1
      %p106 = por %p104, %p105
      %p108 = scmp.ne.s32.totalorder %s93, %s107
      %p109 = scmp.eq.s32.totalorder %s20, 0
      %p110 = por %p108, %p109
      %s112 = sadd.s32 %s111, 1
      %p115 = scmp.eq.s32.totalorder %s14, 1
      %p116 = scmp.ne.s32.totalorder %s111, %s113
      %p117 = scmp.eq.s32.totalorder %s14, 0
      %p118 = por %p116, %p117
      %p119 = scmp.ne.s32.totalorder %s111, %s113
      %p120 = scmp.eq.s32.totalorder %s19, 1
      %p121 = por %p119, %p120
      %p122 = scmp.ne.s32.totalorder %s113, %s114
      %p123 = scmp.eq.s32.totalorder %s19, 0
      %p124 = por %p122, %p123
      %p125 = scmp.ne.s32.totalorder %s113, %s114
      %p126 = scmp.eq.s32.totalorder %s20, 1
      %p127 = por %p125, %p126
      %p129 = scmp.ne.s32.totalorder %s114, %s128
      %p130 = scmp.eq.s32.totalorder %s20, 0
      %p131 = por %p129, %p130
      %s133 = sadd.s32 %s132, 1
      %p136 = scmp.eq.s32.totalorder %s14, 1
      %p137 = scmp.ne.s32.totalorder %s132, %s134
      %p138 = scmp.eq.s32.totalorder %s14, 0
      %p139 = por %p137, %p138
      %p140 = scmp.ne.s32.totalorder %s132, %s134
      %p141 = scmp.eq.s32.totalorder %s19, 1
      %p142 = por %p140, %p141
      %p143 = scmp.ne.s32.totalorder %s134, %s135
      %p144 = scmp.eq.s32.totalorder %s19, 0
      %p145 = por %p143, %p144
      %p146 = scmp.ne.s32.totalorder %s134, %s135
      %p147 = scmp.eq.s32.totalorder %s20, 1
      %p148 = por %p146, %p147
      %p150 = scmp.ne.s32.totalorder %s135, %s149
      %p151 = scmp.eq.s32.totalorder %s20, 0
      %p152 = por %p150, %p151
      %s154 = sadd.s32 %s153, 1
      %p157 = scmp.eq.s32.totalorder %s14, 1
      %p158 = scmp.ne.s32.totalorder %s153, %s155
      %p159 = scmp.eq.s32.totalorder %s14, 0
      %p160 = por %p158, %p159
      %p161 = scmp.ne.s32.totalorder %s153, %s155
      %p162 = scmp.eq.s32.totalorder %s19, 1
      %p163 = por %p161, %p162
      %p164 = scmp.ne.s32.totalorder %s155, %s156
      %p165 = scmp.eq.s32.totalorder %s19, 0
      %p166 = por %p164, %p165
      %p167 = scmp.ne.s32.totalorder %s155, %s156
      %p168 = scmp.eq.s32.totalorder %s20, 1
      %p169 = por %p167, %p168
      %p171 = scmp.ne.s32.totalorder %s156, %s170
      %p172 = scmp.eq.s32.totalorder %s20, 0
      %p173 = por %p171, %p172
      %s174 = ssub.s32 %s14, %s21
      %p175 = scmp.eq.s32.totalorder %s174, 0
      %s177 = sadd.s32 %s176, 1
      %s178 = scalar_select %p175, %s176, %s177
      %p181 = pneg %p175
      %p182 = scmp.eq.s32.totalorder %s14, 1
      %p183 = por %p181, %p182
      %p184 = scmp.ne.s32.totalorder %s176, %s179
      %p185 = scmp.eq.s32.totalorder %s14, 0
      %p186 = por %p184, %p185
      %p187 = scmp.ne.s32.totalorder %s176, %s179
      %p188 = scmp.eq.s32.totalorder %s19, 1
      %p189 = por %p187, %p188
      %p190 = scmp.ne.s32.totalorder %s179, %s180
      %p191 = scmp.eq.s32.totalorder %s19, 0
      %p192 = por %p190, %p191
      %p193 = scmp.ne.s32.totalorder %s179, %s180
      %p194 = scmp.eq.s32.totalorder %s20, 1
      %p195 = por %p193, %p194
      %p197 = scmp.ne.s32.totalorder %s180, %s196
      %p198 = scmp.eq.s32.totalorder %s20, 0
      %p199 = por %p197, %p198
      %p200 = scmp.le.s32.totalorder 1, %s14
      %p201 = scmp.lt.s32.totalorder %s14, 3
      %p202 = pnand %p200, %p201
      %p203 = pneg %p202
      // Predicated region
      $region9: #{_actor_forward.1} parent=5 // pred_check
        _
      $region10: #{_actor_forward.1} parent=5 // pred_check_branch
        %205 = sbr.rel (%p202) target = $region12
      $region11: #{_actor_forward.1} parent=5 // pred_region
        %s206 = ssub.s32 %s14, 1
        // Predicated region
        $region13: #{_actor_forward.1} parent=11 // pred_check
          %p207 = pneg %p61
        $region14: #{_actor_forward.1} parent=11 // pred_check_branch
          %209 = sbr.rel (%p207) target = $region16
        $region15: #{_actor_forward.1} parent=11 // pred_region
          %s211 = ssub.s32 256, 256
          %212 = vsyncadd [#allocation3], %s211
          %s213 = sshll.u32 [#allocation2], 4
          %s214 = int_to_ptr.vmem [resolvable:$true] %s213
          %219 = dma.hbm_to_vmem [thread:$0]  %s1, 256, %s214, [#allocation3], 128, 128, 8
        $region16: #{_actor_forward.1} parent=11 // pred_fallthru
          _
        // Predicated region
        $region17: #{_actor_forward.1} parent=11 // pred_check
          %p220 = pneg %p82
        $region18: #{_actor_forward.1} parent=11 // pred_check_branch
          %222 = sbr.rel (%p220) target = $region20
        $region19: #{_actor_forward.1} parent=11 // pred_region
          _
        $region20: #{_actor_forward.1} parent=11 // pred_fallthru
          _
        // Predicated region
        $region21: #{_actor_forward.1} parent=11 // pred_check
          %p223 = pneg %p103
        $region22: #{_actor_forward.1} parent=11 // pred_check_branch
          %225 = sbr.rel (%p223) target = $region24
        $region23: #{_actor_forward.1} parent=11 // pred_region
          _
        $region24: #{_actor_forward.1} parent=11 // pred_fallthru
          _
        // Predicated region
        $region25: #{_actor_forward.1} parent=11 // pred_check
          %p226 = pneg %p124
        $region26: #{_actor_forward.1} parent=11 // pred_check_branch
          %228 = sbr.rel (%p226) target = $region28
        $region27: #{_actor_forward.1} parent=11 // pred_region
          _
        $region28: #{_actor_forward.1} parent=11 // pred_fallthru
          _
        // Predicated region
        $region29: #{_actor_forward.1} parent=11 // pred_check
          %p229 = pneg %p145
        $region30: #{_actor_forward.1} parent=11 // pred_check_branch
          %231 = sbr.rel (%p229) target = $region32
        $region31: #{_actor_forward.1} parent=11 // pred_region
          _
        $region32: #{_actor_forward.1} parent=11 // pred_fallthru
          _
        // Predicated region
        $region33: #{_actor_forward.1} parent=11 // pred_check
          %p232 = pneg %p166
        $region34: #{_actor_forward.1} parent=11 // pred_check_branch
          %234 = sbr.rel (%p232) target = $region36
        $region35: #{_actor_forward.1} parent=11 // pred_region
          _
        $region36: #{_actor_forward.1} parent=11 // pred_fallthru
          _
      $region12: #{_actor_forward.1} parent=5 // pred_fallthru
        _
      %p235 = scmp.lt.s32.totalorder %s14, 2
      // Predicated region
      $region37: #{_actor_forward.1} parent=5 // pred_check
        %p236 = pneg %p235
      $region38: #{_actor_forward.1} parent=5 // pred_check_branch
        %238 = sbr.rel (%p236) target = $region40
      $region39: #{_actor_forward.1} parent=5 // pred_region
        // Predicated region
        $region41: #{_actor_forward.1} parent=39 // pred_check
          %p239 = pneg %p34
        $region42: #{_actor_forward.1} parent=39 // pred_check_branch
          %241 = sbr.rel (%p239) target = $region44
        $region43: #{_actor_forward.1} parent=39 // pred_region
          %s242 = smul.u32 32, %s14
          %p243 = scmp.lt.s32.totalorder %s242, 63
          %s244 = scalar_select %p243, %s242, 63
          %s245 = smul.addr %s244, 4
          %s246 = scalar_lea.vmem %s0, %s245
          %s247 = smul.u32 32, %s14
        $region44: #{_actor_forward.1} parent=39 // pred_fallthru
          _
      $region40: #{_actor_forward.1} parent=5 // pred_fallthru
        _
      %p248 = scmp.le.s32.totalorder 1, %s14
      %p249 = scmp.lt.s32.totalorder %s14, 3
      %p250 = pnand %p248, %p249
      %p251 = pneg %p250
      // Predicated region
      $region45: #{_actor_forward.1} parent=5 // pred_check
        _
      $region46: #{_actor_forward.1} parent=5 // pred_check_branch
        %253 = sbr.rel (%p250) target = $region48
      $region47: #{_actor_forward.1} parent=5 // pred_region
        %s254 = ssub.s32 %s14, 1
        // Predicated region
        $region49: #{_actor_forward.1} parent=47 // pred_check
          %p255 = pneg %p61
        $region50: #{_actor_forward.1} parent=47 // pred_check_branch
          %257 = sbr.rel (%p255) target = $region52
        $region51: #{_actor_forward.1} parent=47 // pred_region
          %258 = dma.done [#allocation3], 256
        $region52: #{_actor_forward.1} parent=47 // pred_fallthru
          _
        %s259 = smul.u32 32, %s19
        %p260 = scmp.lt.s32.totalorder %s259, 63
        %s261 = scalar_select %p260, %s259, 63
        %s262 = smul.addr %s261, 4
        %s263 = scalar_lea.vmem %s0, %s262
        %p264 = pneg %p40
        %p265 = pneg %p37
        %p266 = pneg %p61
        %p267 = pneg %p58
        %p268 = pneg %p82
        %p269 = pneg %p79
        %p270 = pneg %p103
        %p271 = pneg %p100
        %p272 = pneg %p124
        %p273 = pneg %p121
        %p274 = pneg %p145
        %p275 = pneg %p142
        %p276 = pneg %p166
        %p277 = pneg %p163
        %p278 = pneg %p192
        %p279 = pneg %p189
        %s280 = smul.u32 32, %s19
        %p281 = scmp.lt.s32.totalorder %s280, 63
        %s282 = scalar_select %p281, %s280, 63
        %s283 = smul.addr %s282, 4
        %s284 = scalar_lea.vmem %s7, %s283
        %s285 = smul.u32 32, %s19
        %p286 = scmp.lt.s32.totalorder %s285, 63
        %s287 = scalar_select %p286, %s285, 63
        %s288 = smul.addr %s287, 4
        %s289 = scalar_lea.vmem %s0, %s288
        %s290 = smul.u32 32, %s19
        %s291 = smul.u32 32, %s19
        %p292 = scmp.lt.s32.totalorder %s291, 63
        %s293 = scalar_select %p292, %s291, 63
        %s294 = smul.addr %s293, 4
        %s295 = scalar_lea.vmem %s7, %s294
        %s296 = smul.u32 32, %s19
        %v298 = vld [vmem:[%s289] sm:$0xf]
        %v299 = vld [vmem:[%s289 + $0x4] sm:$0xf]
        %v300 = vld [vmem:[%s289 + $0x8] sm:$0xf]
        %v301 = vld [vmem:[%s289 + $0xc] sm:$0xf]
        %v302 = vld [vmem:[%s289 + $0x10] sm:$0xf]
        %v303 = vld [vmem:[%s289 + $0x14] sm:$0xf]
        %v304 = vld [vmem:[%s289 + $0x18] sm:$0xf]
        %v305 = vld [vmem:[%s289 + $0x1c] sm:$0xf]
        %v306 = vld [vmem:[%s289 + $0x20] sm:$0xf]
        %v307 = vld [vmem:[%s289 + $0x24] sm:$0xf]
        %v308 = vld [vmem:[%s289 + $0x28] sm:$0xf]
        %v309 = vld [vmem:[%s289 + $0x2c] sm:$0xf]
        %v310 = vld [vmem:[%s289 + $0x30] sm:$0xf]
        %v311 = vld [vmem:[%s289 + $0x34] sm:$0xf]
        %v312 = vld [vmem:[%s289 + $0x38] sm:$0xf]
        %v313 = vld [vmem:[%s289 + $0x3c] sm:$0xf]
        %v314 = vld [vmem:[%s289 + $0x40] sm:$0xf]
        %v315 = vld [vmem:[%s289 + $0x44] sm:$0xf]
        %v316 = vld [vmem:[%s289 + $0x48] sm:$0xf]
        %v317 = vld [vmem:[%s289 + $0x4c] sm:$0xf]
        %v318 = vld [vmem:[%s289 + $0x50] sm:$0xf]
        %v319 = vld [vmem:[%s289 + $0x54] sm:$0xf]
        %v320 = vld [vmem:[%s289 + $0x58] sm:$0xf]
        %v321 = vld [vmem:[%s289 + $0x5c] sm:$0xf]
        %v322 = vld [vmem:[%s289 + $0x60] sm:$0xf]
        %v323 = vld [vmem:[%s289 + $0x64] sm:$0xf]
        %v324 = vld [vmem:[%s289 + $0x68] sm:$0xf]
        %v325 = vld [vmem:[%s289 + $0x6c] sm:$0xf]
        %v326 = vld [vmem:[%s289 + $0x70] sm:$0xf]
        %v327 = vld [vmem:[%s289 + $0x74] sm:$0xf]
        %v328 = vld [vmem:[%s289 + $0x78] sm:$0xf]
        %v329 = vld [vmem:[%s289 + $0x7c] sm:$0xf]
        %v330 = vld [vmem:[#allocation2] sm:$0xff]
        %v331 = vld [vmem:[#allocation2 + $0x8] sm:$0xff]
        %v332 = vld [vmem:[%s2] sm:$0x3]
        %v334 = vlaneseq
        %v335 = vshrl.u32 %v334, 7
        %v336 = vsub.s32 0, %v335
        %v337 = vrot.slane %v332, %v336
        %v338 = vlaneseq
        %v339 = vshrl.u32 %v338, 7
        %v340 = vsub.s32 1, %v339
        %v341 = vrot.slane %v332, %v340
        %v376 = vunpack.c.l.b16 %v298
        %v377 = vunpack.c.l.b16 %v299
        %v378 = vunpack.c.l.b16 %v300
        %v379 = vunpack.c.l.b16 %v301
        %v380 = vunpack.c.l.b16 %v302
        %v381 = vunpack.c.l.b16 %v303
        %v382 = vunpack.c.l.b16 %v304
        %v383 = vunpack.c.l.b16 %v305
        %v384 = vunpack.c.l.b16 %v306
        %v385 = vunpack.c.l.b16 %v307
        %v386 = vunpack.c.l.b16 %v308
        %v387 = vunpack.c.l.b16 %v309
        %v388 = vunpack.c.l.b16 %v310
        %v389 = vunpack.c.l.b16 %v311
        %v390 = vunpack.c.l.b16 %v312
        %v391 = vunpack.c.l.b16 %v313
        %v392 = vunpack.c.l.b16 %v314
        %v393 = vunpack.c.l.b16 %v315
        %v394 = vunpack.c.l.b16 %v316
        %v395 = vunpack.c.l.b16 %v317
        %v396 = vunpack.c.l.b16 %v318
        %v397 = vunpack.c.l.b16 %v319
        %v398 = vunpack.c.l.b16 %v320
        %v399 = vunpack.c.l.b16 %v321
        %v400 = vunpack.c.l.b16 %v322
        %v401 = vunpack.c.l.b16 %v323
        %v402 = vunpack.c.l.b16 %v324
        %v403 = vunpack.c.l.b16 %v325
        %v404 = vunpack.c.l.b16 %v326
        %v405 = vunpack.c.l.b16 %v327
        %v406 = vunpack.c.l.b16 %v328
        %v407 = vunpack.c.l.b16 %v329
        %v408 = vpack.c.b16 %v377, %v376
        %v409 = vpack.c.b16 %v379, %v378
        %v410 = vpack.c.b16 %v381, %v380
        %v411 = vpack.c.b16 %v383, %v382
        %v412 = vpack.c.b16 %v385, %v384
        %v413 = vpack.c.b16 %v387, %v386
        %v414 = vpack.c.b16 %v389, %v388
        %v415 = vpack.c.b16 %v391, %v390
        %v416 = vpack.c.b16 %v393, %v392
        %v417 = vpack.c.b16 %v395, %v394
        %v418 = vpack.c.b16 %v397, %v396
        %v419 = vpack.c.b16 %v399, %v398
        %v420 = vpack.c.b16 %v401, %v400
        %v421 = vpack.c.b16 %v403, %v402
        %v422 = vpack.c.b16 %v405, %v404
        %v423 = vpack.c.b16 %v407, %v406
        %v426 = vunpack.c.l.b16 %v330
        %v427 = vunpack.c.h.b16 %v330
        %v428 = vunpack.c.l.b16 %v331
        %v429 = vunpack.c.h.b16 %v331
        %v430 = vpack.c.b16 %v428, %v426
        %v431 = vpack.c.b16 %v429, %v427
        %vm434 = vcmask 130048
        %v436 = vsel %vm434, %v408, 0
        %v439 = vsel %vm434, %v409, 0
        %v442 = vsel %vm434, %v410, 0
        %v445 = vsel %vm434, %v411, 0
        %v448 = vsel %vm434, %v412, 0
        %v451 = vsel %vm434, %v413, 0
        %v454 = vsel %vm434, %v414, 0
        %v457 = vsel %vm434, %v415, 0
        %v460 = vsel %vm434, %v416, 0
        %v463 = vsel %vm434, %v417, 0
        %v466 = vsel %vm434, %v418, 0
        %v469 = vsel %vm434, %v419, 0
        %v472 = vsel %vm434, %v420, 0
        %v475 = vsel %vm434, %v421, 0
        %v478 = vsel %vm434, %v422, 0
        %v481 = vsel %vm434, %v423, 0
        %483 = vmatprep.subr.bf16.mxu0 %v431
        %484 = vmatpush1.bf16.msra.mxu0 %v430
        %485 = vmatprep.subr.bf16.mxu0 0
        %486 = vmatpush1.bf16.msra.mxu0 0
        %487 = vmatprep.subr.bf16.mxu0 0
        %488 = vmatpush1.bf16.msra.mxu0 0
        %489 = vmatprep.subr.bf16.mxu0 0
        %490 = vmatpush1.bf16.msra.mxu0 0
        %491 = vmatprep.subr.bf16.mxu0 0
        %492 = vmatpush1.bf16.msra.mxu0 0
        %493 = vmatprep.subr.bf16.mxu0 0
        %494 = vmatpush1.bf16.msra.mxu0 0
        %495 = vmatprep.subr.bf16.mxu0 0
        %496 = vmatpush1.bf16.msra.mxu0 0
        %497 = vmatprep.subr.bf16.mxu0 0
        %498 = vmatpush1.bf16.msra.mxu0 0
        %499 = vmatprep.subr.bf16.mxu0 0
        %500 = vmatpush1.bf16.msra.mxu0 0
        %501 = vmatprep.subr.bf16.mxu0 0
        %502 = vmatpush1.bf16.msra.mxu0 0
        %503 = vmatprep.subr.bf16.mxu0 0
        %504 = vmatpush1.bf16.msra.mxu0 0
        %505 = vmatprep.subr.bf16.mxu0 0
        %506 = vmatpush1.bf16.msra.mxu0 0
        %507 = vmatprep.subr.bf16.mxu0 0
        %508 = vmatpush1.bf16.msra.mxu0 0
        %509 = vmatprep.subr.bf16.mxu0 0
        %510 = vmatpush1.bf16.msra.mxu0 0
        %511 = vmatprep.subr.bf16.mxu0 0
        %512 = vmatpush1.bf16.msra.mxu0 0
        %513 = vmatprep.subr.bf16.mxu0 0
        %514 = vmatpush1.bf16.msra.mxu0 0
        %515 = vmatprep.mubr.bf16.mxu0 0
        %516 = vmatmul.mubr.bf16.gmra.mrb[0].mxu0 %v436
        %v517 = vpop.f32.mrb[0].mxu0
        %v518 = vadd.f32 %v337, %v517
        %v519 = vpop.f32.mrb[0].mxu0
        %v520 = vadd.f32 %v341, %v519
        %v521 = vpop.f32.mrb[0].mxu0
        %v522 = vadd.f32 %v337, %v521
        %v523 = vpop.f32.mrb[0].mxu0
        %v524 = vadd.f32 %v341, %v523
        %525 = vmatprep.mubr.bf16.mxu0 0
        %526 = vmatmul.mubr.bf16.gmra.mrb[0].mxu0 %v439
        %v527 = vpop.f32.mrb[0].mxu0
        %v528 = vadd.f32 %v337, %v527
        %v529 = vpop.f32.mrb[0].mxu0
        %v530 = vadd.f32 %v341, %v529
        %v531 = vpop.f32.mrb[0].mxu0
        %v532 = vadd.f32 %v337, %v531
        %v533 = vpop.f32.mrb[0].mxu0
        %v534 = vadd.f32 %v341, %v533
        %535 = vmatprep.mubr.bf16.mxu0 0
        %536 = vmatmul.mubr.bf16.gmra.mrb[0].mxu0 %v442
        %v537 = vpop.f32.mrb[0].mxu0
        %v538 = vadd.f32 %v337, %v537
        %v539 = vpop.f32.mrb[0].mxu0
        %v540 = vadd.f32 %v341, %v539
        %v541 = vpop.f32.mrb[0].mxu0
        %v542 = vadd.f32 %v337, %v541
        %v543 = vpop.f32.mrb[0].mxu0
        %v544 = vadd.f32 %v341, %v543
        %545 = vmatprep.mubr.bf16.mxu0 0
        %546 = vmatmul.mubr.bf16.gmra.mrb[0].mxu0 %v445
        %v547 = vpop.f32.mrb[0].mxu0
        %v548 = vadd.f32 %v337, %v547
        %v549 = vpop.f32.mrb[0].mxu0
        %v550 = vadd.f32 %v341, %v549
        %v551 = vpop.f32.mrb[0].mxu0
        %v552 = vadd.f32 %v337, %v551
        %v553 = vpop.f32.mrb[0].mxu0
        %v554 = vadd.f32 %v341, %v553
        %555 = vmatprep.mubr.bf16.mxu0 0
        %556 = vmatmul.mubr.bf16.gmra.mrb[0].mxu0 %v448
        %v557 = vpop.f32.mrb[0].mxu0
        %v558 = vadd.f32 %v337, %v557
        %v559 = vpop.f32.mrb[0].mxu0
        %v560 = vadd.f32 %v341, %v559
        %v561 = vpop.f32.mrb[0].mxu0
        %v562 = vadd.f32 %v337, %v561
        %v563 = vpop.f32.mrb[0].mxu0
        %v564 = vadd.f32 %v341, %v563
        %565 = vmatprep.mubr.bf16.mxu0 0
        %566 = vmatmul.mubr.bf16.gmra.mrb[0].mxu0 %v451
        %v567 = vpop.f32.mrb[0].mxu0
        %v568 = vadd.f32 %v337, %v567
        %v569 = vpop.f32.mrb[0].mxu0
        %v570 = vadd.f32 %v341, %v569
        %v571 = vpop.f32.mrb[0].mxu0
        %v572 = vadd.f32 %v337, %v571
        %v573 = vpop.f32.mrb[0].mxu0
        %v574 = vadd.f32 %v341, %v573
        %575 = vmatprep.mubr.bf16.mxu0 0
        %576 = vmatmul.mubr.bf16.gmra.mrb[0].mxu0 %v454
        %v577 = vpop.f32.mrb[0].mxu0
        %v578 = vadd.f32 %v337, %v577
        %v579 = vpop.f32.mrb[0].mxu0
        %v580 = vadd.f32 %v341, %v579
        %v581 = vpop.f32.mrb[0].mxu0
        %v582 = vadd.f32 %v337, %v581
        %v583 = vpop.f32.mrb[0].mxu0
        %v584 = vadd.f32 %v341, %v583
        %585 = vmatprep.mubr.bf16.mxu0 0
        %586 = vmatmul.mubr.bf16.gmra.mrb[0].mxu0 %v457
        %v587 = vpop.f32.mrb[0].mxu0
        %v588 = vadd.f32 %v337, %v587
        %v589 = vpop.f32.mrb[0].mxu0
        %v590 = vadd.f32 %v341, %v589
        %v591 = vpop.f32.mrb[0].mxu0
        %v592 = vadd.f32 %v337, %v591
        %v593 = vpop.f32.mrb[0].mxu0
        %v594 = vadd.f32 %v341, %v593
        %595 = vmatprep.mubr.bf16.mxu0 0
        %596 = vmatmul.mubr.bf16.gmra.mrb[0].mxu0 %v460
        %v597 = vpop.f32.mrb[0].mxu0
        %v598 = vadd.f32 %v337, %v597
        %v599 = vpop.f32.mrb[0].mxu0
        %v600 = vadd.f32 %v341, %v599
        %v601 = vpop.f32.mrb[0].mxu0
        %v602 = vadd.f32 %v337, %v601
        %v603 = vpop.f32.mrb[0].mxu0
        %v604 = vadd.f32 %v341, %v603
        %605 = vmatprep.mubr.bf16.mxu0 0
        %606 = vmatmul.mubr.bf16.gmra.mrb[0].mxu0 %v463
        %v607 = vpop.f32.mrb[0].mxu0
        %v608 = vadd.f32 %v337, %v607
        %v609 = vpop.f32.mrb[0].mxu0
        %v610 = vadd.f32 %v341, %v609
        %v611 = vpop.f32.mrb[0].mxu0
        %v612 = vadd.f32 %v337, %v611
        %v613 = vpop.f32.mrb[0].mxu0
        %v614 = vadd.f32 %v341, %v613
        %615 = vmatprep.mubr.bf16.mxu0 0
        %616 = vmatmul.mubr.bf16.gmra.mrb[0].mxu0 %v466
        %v617 = vpop.f32.mrb[0].mxu0
        %v618 = vadd.f32 %v337, %v617
        %v619 = vpop.f32.mrb[0].mxu0
        %v620 = vadd.f32 %v341, %v619
        %v621 = vpop.f32.mrb[0].mxu0
        %v622 = vadd.f32 %v337, %v621
        %v623 = vpop.f32.mrb[0].mxu0
        %v624 = vadd.f32 %v341, %v623
        %625 = vmatprep.mubr.bf16.mxu0 0
        %626 = vmatmul.mubr.bf16.gmra.mrb[0].mxu0 %v469
        %v627 = vpop.f32.mrb[0].mxu0
        %v628 = vadd.f32 %v337, %v627
        %v629 = vpop.f32.mrb[0].mxu0
        %v630 = vadd.f32 %v341, %v629
        %v631 = vpop.f32.mrb[0].mxu0
        %v632 = vadd.f32 %v337, %v631
        %v633 = vpop.f32.mrb[0].mxu0
        %v634 = vadd.f32 %v341, %v633
        %635 = vmatprep.mubr.bf16.mxu0 0
        %636 = vmatmul.mubr.bf16.gmra.mrb[0].mxu0 %v472
        %v637 = vpop.f32.mrb[0].mxu0
        %v638 = vadd.f32 %v337, %v637
        %v639 = vpop.f32.mrb[0].mxu0
        %v640 = vadd.f32 %v341, %v639
        %v641 = vpop.f32.mrb[0].mxu0
        %v642 = vadd.f32 %v337, %v641
        %v643 = vpop.f32.mrb[0].mxu0
        %v644 = vadd.f32 %v341, %v643
        %645 = vmatprep.mubr.bf16.mxu0 0
        %646 = vmatmul.mubr.bf16.gmra.mrb[0].mxu0 %v475
        %v647 = vpop.f32.mrb[0].mxu0
        %v648 = vadd.f32 %v337, %v647
        %v649 = vpop.f32.mrb[0].mxu0
        %v650 = vadd.f32 %v341, %v649
        %v651 = vpop.f32.mrb[0].mxu0
        %v652 = vadd.f32 %v337, %v651
        %v653 = vpop.f32.mrb[0].mxu0
        %v654 = vadd.f32 %v341, %v653
        %655 = vmatprep.mubr.bf16.mxu0 0
        %656 = vmatmul.mubr.bf16.gmra.mrb[0].mxu0 %v478
        %v657 = vpop.f32.mrb[0].mxu0
        %v658 = vadd.f32 %v337, %v657
        %v659 = vpop.f32.mrb[0].mxu0
        %v660 = vadd.f32 %v341, %v659
        %v661 = vpop.f32.mrb[0].mxu0
        %v662 = vadd.f32 %v337, %v661
        %v663 = vpop.f32.mrb[0].mxu0
        %v664 = vadd.f32 %v341, %v663
        %665 = vmatprep.mubr.bf16.mxu0 0
        %666 = vmatmul.mubr.bf16.gmra.mrb[0].mxu0 %v481
        %v667 = vpop.f32.mrb[0].mxu0
        %v668 = vadd.f32 %v337, %v667
        %v669 = vpop.f32.mrb[0].mxu0
        %v670 = vadd.f32 %v341, %v669
        %v671 = vpop.f32.mrb[0].mxu0
        %v672 = vadd.f32 %v337, %v671
        %v673 = vpop.f32.mrb[0].mxu0
        %v674 = vadd.f32 %v341, %v673
        %675 = vdwg.mxu0
        %v676 = vmax.f32 %v518, 0.0
        %v677 = vmax.f32 %v520, 0.0
        %v678 = vmax.f32 %v522, 0.0
        %v679 = vmax.f32 %v524, 0.0
        %v680 = vmax.f32 %v528, 0.0
        %v681 = vmax.f32 %v530, 0.0
        %v682 = vmax.f32 %v532, 0.0
        %v683 = vmax.f32 %v534, 0.0
        %v684 = vmax.f32 %v538, 0.0
        %v685 = vmax.f32 %v540, 0.0
        %v686 = vmax.f32 %v542, 0.0
        %v687 = vmax.f32 %v544, 0.0
        %v688 = vmax.f32 %v548, 0.0
        %v689 = vmax.f32 %v550, 0.0
        %v690 = vmax.f32 %v552, 0.0
        %v691 = vmax.f32 %v554, 0.0
        %v692 = vmax.f32 %v558, 0.0
        %v693 = vmax.f32 %v560, 0.0
        %v694 = vmax.f32 %v562, 0.0
        %v695 = vmax.f32 %v564, 0.0
        %v696 = vmax.f32 %v568, 0.0
        %v697 = vmax.f32 %v570, 0.0
        %v698 = vmax.f32 %v572, 0.0
        %v699 = vmax.f32 %v574, 0.0
        %v700 = vmax.f32 %v578, 0.0
        %v701 = vmax.f32 %v580, 0.0
        %v702 = vmax.f32 %v582, 0.0
        %v703 = vmax.f32 %v584, 0.0
        %v704 = vmax.f32 %v588, 0.0
        %v705 = vmax.f32 %v590, 0.0
        %v706 = vmax.f32 %v592, 0.0
        %v707 = vmax.f32 %v594, 0.0
        %v708 = vmax.f32 %v598, 0.0
        %v709 = vmax.f32 %v600, 0.0
        %v710 = vmax.f32 %v602, 0.0
        %v711 = vmax.f32 %v604, 0.0
        %v712 = vmax.f32 %v608, 0.0
        %v713 = vmax.f32 %v610, 0.0
        %v714 = vmax.f32 %v612, 0.0
        %v715 = vmax.f32 %v614, 0.0
        %v716 = vmax.f32 %v618, 0.0
        %v717 = vmax.f32 %v620, 0.0
        %v718 = vmax.f32 %v622, 0.0
        %v719 = vmax.f32 %v624, 0.0
        %v720 = vmax.f32 %v628, 0.0
        %v721 = vmax.f32 %v630, 0.0
        %v722 = vmax.f32 %v632, 0.0
        %v723 = vmax.f32 %v634, 0.0
        %v724 = vmax.f32 %v638, 0.0
        %v725 = vmax.f32 %v640, 0.0
        %v726 = vmax.f32 %v642, 0.0
        %v727 = vmax.f32 %v644, 0.0
        %v728 = vmax.f32 %v648, 0.0
        %v729 = vmax.f32 %v650, 0.0
        %v730 = vmax.f32 %v652, 0.0
        %v731 = vmax.f32 %v654, 0.0
        %v732 = vmax.f32 %v658, 0.0
        %v733 = vmax.f32 %v660, 0.0
        %v734 = vmax.f32 %v662, 0.0
        %v735 = vmax.f32 %v664, 0.0
        %v736 = vmax.f32 %v668, 0.0
        %v737 = vmax.f32 %v670, 0.0
        %v738 = vmax.f32 %v672, 0.0
        %v739 = vmax.f32 %v674, 0.0
        %v740 = vpack.c.bf16 %v678, %v676
        %v741 = vpack.c.bf16 %v679, %v677
        %v742 = vpack.c.bf16 %v682, %v680
        %v743 = vpack.c.bf16 %v683, %v681
        %v744 = vpack.c.bf16 %v686, %v684
        %v745 = vpack.c.bf16 %v687, %v685
        %v746 = vpack.c.bf16 %v690, %v688
        %v747 = vpack.c.bf16 %v691, %v689
        %v748 = vpack.c.bf16 %v694, %v692
        %v749 = vpack.c.bf16 %v695, %v693
        %v750 = vpack.c.bf16 %v698, %v696
        %v751 = vpack.c.bf16 %v699, %v697
        %v752 = vpack.c.bf16 %v702, %v700
        %v753 = vpack.c.bf16 %v703, %v701
        %v754 = vpack.c.bf16 %v706, %v704
        %v755 = vpack.c.bf16 %v707, %v705
        %v756 = vpack.c.bf16 %v710, %v708
        %v757 = vpack.c.bf16 %v711, %v709
        %v758 = vpack.c.bf16 %v714, %v712
        %v759 = vpack.c.bf16 %v715, %v713
        %v760 = vpack.c.bf16 %v718, %v716
        %v761 = vpack.c.bf16 %v719, %v717
        %v762 = vpack.c.bf16 %v722, %v720
        %v763 = vpack.c.bf16 %v723, %v721
        %v764 = vpack.c.bf16 %v726, %v724
        %v765 = vpack.c.bf16 %v727, %v725
        %v766 = vpack.c.bf16 %v730, %v728
        %v767 = vpack.c.bf16 %v731, %v729
        %v768 = vpack.c.bf16 %v734, %v732
        %v769 = vpack.c.bf16 %v735, %v733
        %v770 = vpack.c.bf16 %v738, %v736
        %v771 = vpack.c.bf16 %v739, %v737
        %v772 = vld [vmem:[%s3] sm:$0xff]
        %v773 = vld [vmem:[%s3 + $0x8] sm:$0xff]
        %v774 = vld [vmem:[%s3 + $0x10] sm:$0xff]
        %v775 = vld [vmem:[%s3 + $0x18] sm:$0xff]
        %v776 = vld [vmem:[%s3 + $0x20] sm:$0xff]
        %v777 = vld [vmem:[%s3 + $0x28] sm:$0xff]
        %v778 = vld [vmem:[%s3 + $0x30] sm:$0xff]
        %v779 = vld [vmem:[%s3 + $0x38] sm:$0xff]
        %v780 = vld [vmem:[%s3 + $0x40] sm:$0xff]
        %v781 = vld [vmem:[%s3 + $0x48] sm:$0xff]
        %v782 = vld [vmem:[%s3 + $0x50] sm:$0xff]
        %v783 = vld [vmem:[%s3 + $0x58] sm:$0xff]
        %v784 = vld [vmem:[%s3 + $0x60] sm:$0xff]
        %v785 = vld [vmem:[%s3 + $0x68] sm:$0xff]
        %v786 = vld [vmem:[%s3 + $0x70] sm:$0xff]
        %v787 = vld [vmem:[%s3 + $0x78] sm:$0xff]
        %v788 = vld [vmem:[%s3 + $0x80] sm:$0xff]
        %v789 = vld [vmem:[%s3 + $0x88] sm:$0xff]
        %v790 = vld [vmem:[%s3 + $0x90] sm:$0xff]
        %v791 = vld [vmem:[%s3 + $0x98] sm:$0xff]
        %v792 = vld [vmem:[%s3 + $0xa0] sm:$0xff]
        %v793 = vld [vmem:[%s3 + $0xa8] sm:$0xff]
        %v794 = vld [vmem:[%s3 + $0xb0] sm:$0xff]
        %v795 = vld [vmem:[%s3 + $0xb8] sm:$0xff]
        %v796 = vld [vmem:[%s3 + $0xc0] sm:$0xff]
        %v797 = vld [vmem:[%s3 + $0xc8] sm:$0xff]
        %v798 = vld [vmem:[%s3 + $0xd0] sm:$0xff]
        %v799 = vld [vmem:[%s3 + $0xd8] sm:$0xff]
        %v800 = vld [vmem:[%s3 + $0xe0] sm:$0xff]
        %v801 = vld [vmem:[%s3 + $0xe8] sm:$0xff]
        %v802 = vld [vmem:[%s3 + $0xf0] sm:$0xff]
        %v803 = vld [vmem:[%s3 + $0xf8] sm:$0xff]
        %v804 = vld [vmem:[%s4] sm:$0x3]
        %v806 = vlaneseq
        %v807 = vshrl.u32 %v806, 7
        %v808 = vsub.s32 0, %v807
        %v809 = vrot.slane %v804, %v808
        %v810 = vlaneseq
        %v811 = vshrl.u32 %v810, 7
        %v812 = vsub.s32 1, %v811
        %v813 = vrot.slane %v804, %v812
        %v848 = vunpack.c.l.b16 %v772
        %v849 = vunpack.c.h.b16 %v772
        %v850 = vunpack.c.l.b16 %v773
        %v851 = vunpack.c.h.b16 %v773
        %v852 = vunpack.c.l.b16 %v774
        %v853 = vunpack.c.h.b16 %v774
        %v854 = vunpack.c.l.b16 %v775
        %v855 = vunpack.c.h.b16 %v775
        %v856 = vunpack.c.l.b16 %v776
        %v857 = vunpack.c.h.b16 %v776
        %v858 = vunpack.c.l.b16 %v777
        %v859 = vunpack.c.h.b16 %v777
        %v860 = vunpack.c.l.b16 %v778
        %v861 = vunpack.c.h.b16 %v778
        %v862 = vunpack.c.l.b16 %v779
        %v863 = vunpack.c.h.b16 %v779
        %v864 = vunpack.c.l.b16 %v780
        %v865 = vunpack.c.h.b16 %v780
        %v866 = vunpack.c.l.b16 %v781
        %v867 = vunpack.c.h.b16 %v781
        %v868 = vunpack.c.l.b16 %v782
        %v869 = vunpack.c.h.b16 %v782
        %v870 = vunpack.c.l.b16 %v783
        %v871 = vunpack.c.h.b16 %v783
        %v872 = vunpack.c.l.b16 %v784
        %v873 = vunpack.c.h.b16 %v784
        %v874 = vunpack.c.l.b16 %v785
        %v875 = vunpack.c.h.b16 %v785
        %v876 = vunpack.c.l.b16 %v786
        %v877 = vunpack.c.h.b16 %v786
        %v878 = vunpack.c.l.b16 %v787
        %v879 = vunpack.c.h.b16 %v787
        %v880 = vunpack.c.l.b16 %v788
        %v881 = vunpack.c.h.b16 %v788
        %v882 = vunpack.c.l.b16 %v789
        %v883 = vunpack.c.h.b16 %v789
        %v884 = vunpack.c.l.b16 %v790
        %v885 = vunpack.c.h.b16 %v790
        %v886 = vunpack.c.l.b16 %v791
        %v887 = vunpack.c.h.b16 %v791
        %v888 = vunpack.c.l.b16 %v792
        %v889 = vunpack.c.h.b16 %v792
        %v890 = vunpack.c.l.b16 %v793
        %v891 = vunpack.c.h.b16 %v793
        %v892 = vunpack.c.l.b16 %v794
        %v893 = vunpack.c.h.b16 %v794
        %v894 = vunpack.c.l.b16 %v795
        %v895 = vunpack.c.h.b16 %v795
        %v896 = vunpack.c.l.b16 %v796
        %v897 = vunpack.c.h.b16 %v796
        %v898 = vunpack.c.l.b16 %v797
        %v899 = vunpack.c.h.b16 %v797
        %v900 = vunpack.c.l.b16 %v798
        %v901 = vunpack.c.h.b16 %v798
        %v902 = vunpack.c.l.b16 %v799
        %v903 = vunpack.c.h.b16 %v799
        %v904 = vunpack.c.l.b16 %v800
        %v905 = vunpack.c.h.b16 %v800
        %v906 = vunpack.c.l.b16 %v801
        %v907 = vunpack.c.h.b16 %v801
        %v908 = vunpack.c.l.b16 %v802
        %v909 = vunpack.c.h.b16 %v802
        %v910 = vunpack.c.l.b16 %v803
        %v911 = vunpack.c.h.b16 %v803
        %v912 = vpack.c.b16 %v850, %v848
        %v913 = vpack.c.b16 %v851, %v849
        %v914 = vpack.c.b16 %v854, %v852
        %v915 = vpack.c.b16 %v855, %v853
        %v916 = vpack.c.b16 %v858, %v856
        %v917 = vpack.c.b16 %v859, %v857
        %v918 = vpack.c.b16 %v862, %v860
        %v919 = vpack.c.b16 %v863, %v861
        %v920 = vpack.c.b16 %v866, %v864
        %v921 = vpack.c.b16 %v867, %v865
        %v922 = vpack.c.b16 %v870, %v868
        %v923 = vpack.c.b16 %v871, %v869
        %v924 = vpack.c.b16 %v874, %v872
        %v925 = vpack.c.b16 %v875, %v873
        %v926 = vpack.c.b16 %v878, %v876
        %v927 = vpack.c.b16 %v879, %v877
        %v928 = vpack.c.b16 %v882, %v880
        %v929 = vpack.c.b16 %v883, %v881
        %v930 = vpack.c.b16 %v886, %v884
        %v931 = vpack.c.b16 %v887, %v885
        %v932 = vpack.c.b16 %v890, %v888
        %v933 = vpack.c.b16 %v891, %v889
        %v934 = vpack.c.b16 %v894, %v892
        %v935 = vpack.c.b16 %v895, %v893
        %v936 = vpack.c.b16 %v898, %v896
        %v937 = vpack.c.b16 %v899, %v897
        %v938 = vpack.c.b16 %v902, %v900
        %v939 = vpack.c.b16 %v903, %v901
        %v940 = vpack.c.b16 %v906, %v904
        %v941 = vpack.c.b16 %v907, %v905
        %v942 = vpack.c.b16 %v910, %v908
        %v943 = vpack.c.b16 %v911, %v909
        %976 = vmatprep.subr.bf16.mxu0 %v913
        %977 = vmatpush1.bf16.msra.mxu0 %v912
        %978 = vmatprep.subr.bf16.mxu0 %v915
        %979 = vmatpush1.bf16.msra.mxu0 %v914
        %980 = vmatprep.subr.bf16.mxu0 %v917
        %981 = vmatpush1.bf16.msra.mxu0 %v916
        %982 = vmatprep.subr.bf16.mxu0 %v919
        %983 = vmatpush1.bf16.msra.mxu0 %v918
        %984 = vmatprep.subr.bf16.mxu0 %v921
        %985 = vmatpush1.bf16.msra.mxu0 %v920
        %986 = vmatprep.subr.bf16.mxu0 %v923
        %987 = vmatpush1.bf16.msra.mxu0 %v922
        %988 = vmatprep.subr.bf16.mxu0 %v925
        %989 = vmatpush1.bf16.msra.mxu0 %v924
        %990 = vmatprep.subr.bf16.mxu0 %v927
        %991 = vmatpush1.bf16.msra.mxu0 %v926
        %992 = vmatprep.subr.bf16.mxu0 %v929
        %993 = vmatpush1.bf16.msra.mxu0 %v928
        %994 = vmatprep.subr.bf16.mxu0 %v931
        %995 = vmatpush1.bf16.msra.mxu0 %v930
        %996 = vmatprep.subr.bf16.mxu0 %v933
        %997 = vmatpush1.bf16.msra.mxu0 %v932
        %998 = vmatprep.subr.bf16.mxu0 %v935
        %999 = vmatpush1.bf16.msra.mxu0 %v934
        %1000 = vmatprep.subr.bf16.mxu0 %v937
        %1001 = vmatpush1.bf16.msra.mxu0 %v936
        %1002 = vmatprep.subr.bf16.mxu0 %v939
        %1003 = vmatpush1.bf16.msra.mxu0 %v938
        %1004 = vmatprep.subr.bf16.mxu0 %v941
        %1005 = vmatpush1.bf16.msra.mxu0 %v940
        %1006 = vmatprep.subr.bf16.mxu0 %v943
        %1007 = vmatpush1.bf16.msra.mxu0 %v942
        %1008 = vmatprep.mubr.bf16.mxu0 %v741
        %1009 = vmatmul.mubr.bf16.gmra.mrb[0].mxu0 %v740
        %v1010 = vpop.f32.mrb[0].mxu0
        %v1011 = vadd.f32 %v809, %v1010
        %v1012 = vpop.f32.mrb[0].mxu0
        %v1013 = vadd.f32 %v813, %v1012
        %v1014 = vpop.f32.mrb[0].mxu0
        %v1015 = vadd.f32 %v809, %v1014
        %v1016 = vpop.f32.mrb[0].mxu0
        %v1017 = vadd.f32 %v813, %v1016
        %1018 = vmatprep.mubr.bf16.mxu0 %v743
        %1019 = vmatmul.mubr.bf16.gmra.mrb[0].mxu0 %v742
        %v1020 = vpop.f32.mrb[0].mxu0
        %v1021 = vadd.f32 %v809, %v1020
        %v1022 = vpop.f32.mrb[0].mxu0
        %v1023 = vadd.f32 %v813, %v1022
        %v1024 = vpop.f32.mrb[0].mxu0
        %v1025 = vadd.f32 %v809, %v1024
        %v1026 = vpop.f32.mrb[0].mxu0
        %v1027 = vadd.f32 %v813, %v1026
        %1028 = vmatprep.mubr.bf16.mxu0 %v745
        %1029 = vmatmul.mubr.bf16.gmra.mrb[0].mxu0 %v744
        %v1030 = vpop.f32.mrb[0].mxu0
        %v1031 = vadd.f32 %v809, %v1030
        %v1032 = vpop.f32.mrb[0].mxu0
        %v1033 = vadd.f32 %v813, %v1032
        %v1034 = vpop.f32.mrb[0].mxu0
        %v1035 = vadd.f32 %v809, %v1034
        %v1036 = vpop.f32.mrb[0].mxu0
        %v1037 = vadd.f32 %v813, %v1036
        %1038 = vmatprep.mubr.bf16.mxu0 %v747
        %1039 = vmatmul.mubr.bf16.gmra.mrb[0].mxu0 %v746
        %v1040 = vpop.f32.mrb[0].mxu0
        %v1041 = vadd.f32 %v809, %v1040
        %v1042 = vpop.f32.mrb[0].mxu0
        %v1043 = vadd.f32 %v813, %v1042
        %v1044 = vpop.f32.mrb[0].mxu0
        %v1045 = vadd.f32 %v809, %v1044
        %v1046 = vpop.f32.mrb[0].mxu0
        %v1047 = vadd.f32 %v813, %v1046
        %1048 = vmatprep.mubr.bf16.mxu0 %v749
        %1049 = vmatmul.mubr.bf16.gmra.mrb[0].mxu0 %v748
        %v1050 = vpop.f32.mrb[0].mxu0
        %v1051 = vadd.f32 %v809, %v1050
        %v1052 = vpop.f32.mrb[0].mxu0
        %v1053 = vadd.f32 %v813, %v1052
        %v1054 = vpop.f32.mrb[0].mxu0
        %v1055 = vadd.f32 %v809, %v1054
        %v1056 = vpop.f32.mrb[0].mxu0
        %v1057 = vadd.f32 %v813, %v1056
        %1058 = vmatprep.mubr.bf16.mxu0 %v751
        %1059 = vmatmul.mubr.bf16.gmra.mrb[0].mxu0 %v750
        %v1060 = vpop.f32.mrb[0].mxu0
        %v1061 = vadd.f32 %v809, %v1060
        %v1062 = vpop.f32.mrb[0].mxu0
        %v1063 = vadd.f32 %v813, %v1062
        %v1064 = vpop.f32.mrb[0].mxu0
        %v1065 = vadd.f32 %v809, %v1064
        %v1066 = vpop.f32.mrb[0].mxu0
        %v1067 = vadd.f32 %v813, %v1066
        %1068 = vmatprep.mubr.bf16.mxu0 %v753
        %1069 = vmatmul.mubr.bf16.gmra.mrb[0].mxu0 %v752
        %v1070 = vpop.f32.mrb[0].mxu0
        %v1071 = vadd.f32 %v809, %v1070
        %v1072 = vpop.f32.mrb[0].mxu0
        %v1073 = vadd.f32 %v813, %v1072
        %v1074 = vpop.f32.mrb[0].mxu0
        %v1075 = vadd.f32 %v809, %v1074
        %v1076 = vpop.f32.mrb[0].mxu0
        %v1077 = vadd.f32 %v813, %v1076
        %1078 = vmatprep.mubr.bf16.mxu0 %v755
        %1079 = vmatmul.mubr.bf16.gmra.mrb[0].mxu0 %v754
        %v1080 = vpop.f32.mrb[0].mxu0
        %v1081 = vadd.f32 %v809, %v1080
        %v1082 = vpop.f32.mrb[0].mxu0
        %v1083 = vadd.f32 %v813, %v1082
        %v1084 = vpop.f32.mrb[0].mxu0
        %v1085 = vadd.f32 %v809, %v1084
        %v1086 = vpop.f32.mrb[0].mxu0
        %v1087 = vadd.f32 %v813, %v1086
        %1088 = vmatprep.mubr.bf16.mxu0 %v757
        %1089 = vmatmul.mubr.bf16.gmra.mrb[0].mxu0 %v756
        %v1090 = vpop.f32.mrb[0].mxu0
        %v1091 = vadd.f32 %v809, %v1090
        %v1092 = vpop.f32.mrb[0].mxu0
        %v1093 = vadd.f32 %v813, %v1092
        %v1094 = vpop.f32.mrb[0].mxu0
        %v1095 = vadd.f32 %v809, %v1094
        %v1096 = vpop.f32.mrb[0].mxu0
        %v1097 = vadd.f32 %v813, %v1096
        %1098 = vmatprep.mubr.bf16.mxu0 %v759
        %1099 = vmatmul.mubr.bf16.gmra.mrb[0].mxu0 %v758
        %v1100 = vpop.f32.mrb[0].mxu0
        %v1101 = vadd.f32 %v809, %v1100
        %v1102 = vpop.f32.mrb[0].mxu0
        %v1103 = vadd.f32 %v813, %v1102
        %v1104 = vpop.f32.mrb[0].mxu0
        %v1105 = vadd.f32 %v809, %v1104
        %v1106 = vpop.f32.mrb[0].mxu0
        %v1107 = vadd.f32 %v813, %v1106
        %1108 = vmatprep.mubr.bf16.mxu0 %v761
        %1109 = vmatmul.mubr.bf16.gmra.mrb[0].mxu0 %v760
        %v1110 = vpop.f32.mrb[0].mxu0
        %v1111 = vadd.f32 %v809, %v1110
        %v1112 = vpop.f32.mrb[0].mxu0
        %v1113 = vadd.f32 %v813, %v1112
        %v1114 = vpop.f32.mrb[0].mxu0
        %v1115 = vadd.f32 %v809, %v1114
        %v1116 = vpop.f32.mrb[0].mxu0
        %v1117 = vadd.f32 %v813, %v1116
        %1118 = vmatprep.mubr.bf16.mxu0 %v763
        %1119 = vmatmul.mubr.bf16.gmra.mrb[0].mxu0 %v762
        %v1120 = vpop.f32.mrb[0].mxu0
        %v1121 = vadd.f32 %v809, %v1120
        %v1122 = vpop.f32.mrb[0].mxu0
        %v1123 = vadd.f32 %v813, %v1122
        %v1124 = vpop.f32.mrb[0].mxu0
        %v1125 = vadd.f32 %v809, %v1124
        %v1126 = vpop.f32.mrb[0].mxu0
        %v1127 = vadd.f32 %v813, %v1126
        %1128 = vmatprep.mubr.bf16.mxu0 %v765
        %1129 = vmatmul.mubr.bf16.gmra.mrb[0].mxu0 %v764
        %v1130 = vpop.f32.mrb[0].mxu0
        %v1131 = vadd.f32 %v809, %v1130
        %v1132 = vpop.f32.mrb[0].mxu0
        %v1133 = vadd.f32 %v813, %v1132
        %v1134 = vpop.f32.mrb[0].mxu0
        %v1135 = vadd.f32 %v809, %v1134
        %v1136 = vpop.f32.mrb[0].mxu0
        %v1137 = vadd.f32 %v813, %v1136
        %1138 = vmatprep.mubr.bf16.mxu0 %v767
        %1139 = vmatmul.mubr.bf16.gmra.mrb[0].mxu0 %v766
        %v1140 = vpop.f32.mrb[0].mxu0
        %v1141 = vadd.f32 %v809, %v1140
        %v1142 = vpop.f32.mrb[0].mxu0
        %v1143 = vadd.f32 %v813, %v1142
        %v1144 = vpop.f32.mrb[0].mxu0
        %v1145 = vadd.f32 %v809, %v1144
        %v1146 = vpop.f32.mrb[0].mxu0
        %v1147 = vadd.f32 %v813, %v1146
        %1148 = vmatprep.mubr.bf16.mxu0 %v769
        %1149 = vmatmul.mubr.bf16.gmra.mrb[0].mxu0 %v768
        %v1150 = vpop.f32.mrb[0].mxu0
        %v1151 = vadd.f32 %v809, %v1150
        %v1152 = vpop.f32.mrb[0].mxu0
        %v1153 = vadd.f32 %v813, %v1152
        %v1154 = vpop.f32.mrb[0].mxu0
        %v1155 = vadd.f32 %v809, %v1154
        %v1156 = vpop.f32.mrb[0].mxu0
        %v1157 = vadd.f32 %v813, %v1156
        %1158 = vmatprep.mubr.bf16.mxu0 %v771
        %1159 = vmatmul.mubr.bf16.gmra.mrb[0].mxu0 %v770
        %v1160 = vpop.f32.mrb[0].mxu0
        %v1161 = vadd.f32 %v809, %v1160
        %v1162 = vpop.f32.mrb[0].mxu0
        %v1163 = vadd.f32 %v813, %v1162
        %v1164 = vpop.f32.mrb[0].mxu0
        %v1165 = vadd.f32 %v809, %v1164
        %v1166 = vpop.f32.mrb[0].mxu0
        %v1167 = vadd.f32 %v813, %v1166
        %1168 = vdwg.mxu0
        %v1169 = vmax.f32 %v1011, 0.0
        %v1170 = vmax.f32 %v1013, 0.0
        %v1171 = vmax.f32 %v1015, 0.0
        %v1172 = vmax.f32 %v1017, 0.0
        %v1173 = vmax.f32 %v1021, 0.0
        %v1174 = vmax.f32 %v1023, 0.0
        %v1175 = vmax.f32 %v1025, 0.0
        %v1176 = vmax.f32 %v1027, 0.0
        %v1177 = vmax.f32 %v1031, 0.0
        %v1178 = vmax.f32 %v1033, 0.0
        %v1179 = vmax.f32 %v1035, 0.0
        %v1180 = vmax.f32 %v1037, 0.0
        %v1181 = vmax.f32 %v1041, 0.0
        %v1182 = vmax.f32 %v1043, 0.0
        %v1183 = vmax.f32 %v1045, 0.0
        %v1184 = vmax.f32 %v1047, 0.0
        %v1185 = vmax.f32 %v1051, 0.0
        %v1186 = vmax.f32 %v1053, 0.0
        %v1187 = vmax.f32 %v1055, 0.0
        %v1188 = vmax.f32 %v1057, 0.0
        %v1189 = vmax.f32 %v1061, 0.0
        %v1190 = vmax.f32 %v1063, 0.0
        %v1191 = vmax.f32 %v1065, 0.0
        %v1192 = vmax.f32 %v1067, 0.0
        %v1193 = vmax.f32 %v1071, 0.0
        %v1194 = vmax.f32 %v1073, 0.0
        %v1195 = vmax.f32 %v1075, 0.0
        %v1196 = vmax.f32 %v1077, 0.0
        %v1197 = vmax.f32 %v1081, 0.0
        %v1198 = vmax.f32 %v1083, 0.0
        %v1199 = vmax.f32 %v1085, 0.0
        %v1200 = vmax.f32 %v1087, 0.0
        %v1201 = vmax.f32 %v1091, 0.0
        %v1202 = vmax.f32 %v1093, 0.0
        %v1203 = vmax.f32 %v1095, 0.0
        %v1204 = vmax.f32 %v1097, 0.0
        %v1205 = vmax.f32 %v1101, 0.0
        %v1206 = vmax.f32 %v1103, 0.0
        %v1207 = vmax.f32 %v1105, 0.0
        %v1208 = vmax.f32 %v1107, 0.0
        %v1209 = vmax.f32 %v1111, 0.0
        %v1210 = vmax.f32 %v1113, 0.0
        %v1211 = vmax.f32 %v1115, 0.0
        %v1212 = vmax.f32 %v1117, 0.0
        %v1213 = vmax.f32 %v1121, 0.0
        %v1214 = vmax.f32 %v1123, 0.0
        %v1215 = vmax.f32 %v1125, 0.0
        %v1216 = vmax.f32 %v1127, 0.0
        %v1217 = vmax.f32 %v1131, 0.0
        %v1218 = vmax.f32 %v1133, 0.0
        %v1219 = vmax.f32 %v1135, 0.0
        %v1220 = vmax.f32 %v1137, 0.0
        %v1221 = vmax.f32 %v1141, 0.0
        %v1222 = vmax.f32 %v1143, 0.0
        %v1223 = vmax.f32 %v1145, 0.0
        %v1224 = vmax.f32 %v1147, 0.0
        %v1225 = vmax.f32 %v1151, 0.0
        %v1226 = vmax.f32 %v1153, 0.0
        %v1227 = vmax.f32 %v1155, 0.0
        %v1228 = vmax.f32 %v1157, 0.0
        %v1229 = vmax.f32 %v1161, 0.0
        %v1230 = vmax.f32 %v1163, 0.0
        %v1231 = vmax.f32 %v1165, 0.0
        %v1232 = vmax.f32 %v1167, 0.0
        %v1233 = vpack.c.bf16 %v1171, %v1169
        %v1234 = vpack.c.bf16 %v1172, %v1170
        %v1235 = vpack.c.bf16 %v1175, %v1173
        %v1236 = vpack.c.bf16 %v1176, %v1174
        %v1237 = vpack.c.bf16 %v1179, %v1177
        %v1238 = vpack.c.bf16 %v1180, %v1178
        %v1239 = vpack.c.bf16 %v1183, %v1181
        %v1240 = vpack.c.bf16 %v1184, %v1182
        %v1241 = vpack.c.bf16 %v1187, %v1185
        %v1242 = vpack.c.bf16 %v1188, %v1186
        %v1243 = vpack.c.bf16 %v1191, %v1189
        %v1244 = vpack.c.bf16 %v1192, %v1190
        %v1245 = vpack.c.bf16 %v1195, %v1193
        %v1246 = vpack.c.bf16 %v1196, %v1194
        %v1247 = vpack.c.bf16 %v1199, %v1197
        %v1248 = vpack.c.bf16 %v1200, %v1198
        %v1249 = vpack.c.bf16 %v1203, %v1201
        %v1250 = vpack.c.bf16 %v1204, %v1202
        %v1251 = vpack.c.bf16 %v1207, %v1205
        %v1252 = vpack.c.bf16 %v1208, %v1206
        %v1253 = vpack.c.bf16 %v1211, %v1209
        %v1254 = vpack.c.bf16 %v1212, %v1210
        %v1255 = vpack.c.bf16 %v1215, %v1213
        %v1256 = vpack.c.bf16 %v1216, %v1214
        %v1257 = vpack.c.bf16 %v1219, %v1217
        %v1258 = vpack.c.bf16 %v1220, %v1218
        %v1259 = vpack.c.bf16 %v1223, %v1221
        %v1260 = vpack.c.bf16 %v1224, %v1222
        %v1261 = vpack.c.bf16 %v1227, %v1225
        %v1262 = vpack.c.bf16 %v1228, %v1226
        %v1263 = vpack.c.bf16 %v1231, %v1229
        %v1264 = vpack.c.bf16 %v1232, %v1230
        %v1265 = vld [vmem:[%s5] sm:$0xf]
        %v1266 = vld [vmem:[%s5 + $0x4] sm:$0xf]
        %v1267 = vld [vmem:[%s5 + $0x8] sm:$0xf]
        %v1268 = vld [vmem:[%s5 + $0xc] sm:$0xf]
        %v1269 = vld [vmem:[%s5 + $0x10] sm:$0xf]
        %v1270 = vld [vmem:[%s5 + $0x14] sm:$0xf]
        %v1271 = vld [vmem:[%s5 + $0x18] sm:$0xf]
        %v1272 = vld [vmem:[%s5 + $0x1c] sm:$0xf]
        %v1273 = vld [vmem:[%s5 + $0x20] sm:$0xf]
        %v1274 = vld [vmem:[%s5 + $0x24] sm:$0xf]
        %v1275 = vld [vmem:[%s5 + $0x28] sm:$0xf]
        %v1276 = vld [vmem:[%s5 + $0x2c] sm:$0xf]
        %v1277 = vld [vmem:[%s5 + $0x30] sm:$0xf]
        %v1278 = vld [vmem:[%s5 + $0x34] sm:$0xf]
        %v1279 = vld [vmem:[%s5 + $0x38] sm:$0xf]
        %v1280 = vld [vmem:[%s5 + $0x3c] sm:$0xf]
        %v1281 = vld [vmem:[%s5 + $0x40] sm:$0xf]
        %v1282 = vld [vmem:[%s5 + $0x44] sm:$0xf]
        %v1283 = vld [vmem:[%s5 + $0x48] sm:$0xf]
        %v1284 = vld [vmem:[%s5 + $0x4c] sm:$0xf]
        %v1285 = vld [vmem:[%s5 + $0x50] sm:$0xf]
        %v1286 = vld [vmem:[%s5 + $0x54] sm:$0xf]
        %v1287 = vld [vmem:[%s5 + $0x58] sm:$0xf]
        %v1288 = vld [vmem:[%s5 + $0x5c] sm:$0xf]
        %v1289 = vld [vmem:[%s5 + $0x60] sm:$0xf]
        %v1290 = vld [vmem:[%s5 + $0x64] sm:$0xf]
        %v1291 = vld [vmem:[%s5 + $0x68] sm:$0xf]
        %v1292 = vld [vmem:[%s5 + $0x6c] sm:$0xf]
        %v1293 = vld [vmem:[%s5 + $0x70] sm:$0xf]
        %v1294 = vld [vmem:[%s5 + $0x74] sm:$0xf]
        %v1295 = vld [vmem:[%s5 + $0x78] sm:$0xf]
        %v1296 = vld [vmem:[%s5 + $0x7c] sm:$0xf]
        %v1297 = vld [vmem:[%s6] sm:$0x1]
        %v1299 = vlaneseq
        %v1300 = vshrl.u32 %v1299, 7
        %v1301 = vsub.s32 0, %v1300
        %v1302 = vrot.slane %v1297, %v1301
        %v1336 = vunpack.c.l.b16 %v1265
        %v1337 = vunpack.c.l.b16 %v1266
        %v1338 = vunpack.c.l.b16 %v1267
        %v1339 = vunpack.c.l.b16 %v1268
        %v1340 = vunpack.c.l.b16 %v1269
        %v1341 = vunpack.c.l.b16 %v1270
        %v1342 = vunpack.c.l.b16 %v1271
        %v1343 = vunpack.c.l.b16 %v1272
        %v1344 = vunpack.c.l.b16 %v1273
        %v1345 = vunpack.c.l.b16 %v1274
        %v1346 = vunpack.c.l.b16 %v1275
        %v1347 = vunpack.c.l.b16 %v1276
        %v1348 = vunpack.c.l.b16 %v1277
        %v1349 = vunpack.c.l.b16 %v1278
        %v1350 = vunpack.c.l.b16 %v1279
        %v1351 = vunpack.c.l.b16 %v1280
        %v1352 = vunpack.c.l.b16 %v1281
        %v1353 = vunpack.c.l.b16 %v1282
        %v1354 = vunpack.c.l.b16 %v1283
        %v1355 = vunpack.c.l.b16 %v1284
        %v1356 = vunpack.c.l.b16 %v1285
        %v1357 = vunpack.c.l.b16 %v1286
        %v1358 = vunpack.c.l.b16 %v1287
        %v1359 = vunpack.c.l.b16 %v1288
        %v1360 = vunpack.c.l.b16 %v1289
        %v1361 = vunpack.c.l.b16 %v1290
        %v1362 = vunpack.c.l.b16 %v1291
        %v1363 = vunpack.c.l.b16 %v1292
        %v1364 = vunpack.c.l.b16 %v1293
        %v1365 = vunpack.c.l.b16 %v1294
        %v1366 = vunpack.c.l.b16 %v1295
        %v1367 = vunpack.c.l.b16 %v1296
        %v1368 = vpack.c.b16 %v1337, %v1336
        %v1369 = vpack.c.b16 %v1339, %v1338
        %v1370 = vpack.c.b16 %v1341, %v1340
        %v1371 = vpack.c.b16 %v1343, %v1342
        %v1372 = vpack.c.b16 %v1345, %v1344
        %v1373 = vpack.c.b16 %v1347, %v1346
        %v1374 = vpack.c.b16 %v1349, %v1348
        %v1375 = vpack.c.b16 %v1351, %v1350
        %v1376 = vpack.c.b16 %v1353, %v1352
        %v1377 = vpack.c.b16 %v1355, %v1354
        %v1378 = vpack.c.b16 %v1357, %v1356
        %v1379 = vpack.c.b16 %v1359, %v1358
        %v1380 = vpack.c.b16 %v1361, %v1360
        %v1381 = vpack.c.b16 %v1363, %v1362
        %v1382 = vpack.c.b16 %v1365, %v1364
        %v1383 = vpack.c.b16 %v1367, %v1366
        %1400 = vmatprep.subr.bf16.mxu0 0
        %1401 = vmatpush1.bf16.msra.mxu0 %v1368
        %1402 = vmatprep.subr.bf16.mxu0 0
        %1403 = vmatpush1.bf16.msra.mxu0 %v1369
        %1404 = vmatprep.subr.bf16.mxu0 0
        %1405 = vmatpush1.bf16.msra.mxu0 %v1370
        %1406 = vmatprep.subr.bf16.mxu0 0
        %1407 = vmatpush1.bf16.msra.mxu0 %v1371
        %1408 = vmatprep.subr.bf16.mxu0 0
        %1409 = vmatpush1.bf16.msra.mxu0 %v1372
        %1410 = vmatprep.subr.bf16.mxu0 0
        %1411 = vmatpush1.bf16.msra.mxu0 %v1373
        %1412 = vmatprep.subr.bf16.mxu0 0
        %1413 = vmatpush1.bf16.msra.mxu0 %v1374
        %1414 = vmatprep.subr.bf16.mxu0 0
        %1415 = vmatpush1.bf16.msra.mxu0 %v1375
        %1416 = vmatprep.subr.bf16.mxu0 0
        %1417 = vmatpush1.bf16.msra.mxu0 %v1376
        %1418 = vmatprep.subr.bf16.mxu0 0
        %1419 = vmatpush1.bf16.msra.mxu0 %v1377
        %1420 = vmatprep.subr.bf16.mxu0 0
        %1421 = vmatpush1.bf16.msra.mxu0 %v1378
        %1422 = vmatprep.subr.bf16.mxu0 0
        %1423 = vmatpush1.bf16.msra.mxu0 %v1379
        %1424 = vmatprep.subr.bf16.mxu0 0
        %1425 = vmatpush1.bf16.msra.mxu0 %v1380
        %1426 = vmatprep.subr.bf16.mxu0 0
        %1427 = vmatpush1.bf16.msra.mxu0 %v1381
        %1428 = vmatprep.subr.bf16.mxu0 0
        %1429 = vmatpush1.bf16.msra.mxu0 %v1382
        %1430 = vmatprep.subr.bf16.mxu0 0
        %1431 = vmatpush1.bf16.msra.mxu0 %v1383
        %1432 = vmatprep.mubr.bf16.mxu0 %v1234
        %1433 = vmatmul.mubr.bf16.gmra.mrb[0].mxu0 %v1233
        %v1434 = vpop.f32.mrb[0].mxu0
        %v1435 = vadd.f32 %v1302, %v1434
        %v1436 = vpop.f32.mrb[0].mxu0
        %v1437 = vpop.f32.mrb[0].mxu0
        %v1438 = vadd.f32 %v1302, %v1437
        %v1439 = vpop.f32.mrb[0].mxu0
        %1440 = vmatprep.mubr.bf16.mxu0 %v1236
        %1441 = vmatmul.mubr.bf16.gmra.mrb[0].mxu0 %v1235
        %v1442 = vpop.f32.mrb[0].mxu0
        %v1443 = vadd.f32 %v1302, %v1442
        %v1444 = vpop.f32.mrb[0].mxu0
        %v1445 = vpop.f32.mrb[0].mxu0
        %v1446 = vadd.f32 %v1302, %v1445
        %v1447 = vpop.f32.mrb[0].mxu0
        %1448 = vmatprep.mubr.bf16.mxu0 %v1238
        %1449 = vmatmul.mubr.bf16.gmra.mrb[0].mxu0 %v1237
        %v1450 = vpop.f32.mrb[0].mxu0
        %v1451 = vadd.f32 %v1302, %v1450
        %v1452 = vpop.f32.mrb[0].mxu0
        %v1453 = vpop.f32.mrb[0].mxu0
        %v1454 = vadd.f32 %v1302, %v1453
        %v1455 = vpop.f32.mrb[0].mxu0
        %1456 = vmatprep.mubr.bf16.mxu0 %v1240
        %1457 = vmatmul.mubr.bf16.gmra.mrb[0].mxu0 %v1239
        %v1458 = vpop.f32.mrb[0].mxu0
        %v1459 = vadd.f32 %v1302, %v1458
        %v1460 = vpop.f32.mrb[0].mxu0
        %v1461 = vpop.f32.mrb[0].mxu0
        %v1462 = vadd.f32 %v1302, %v1461
        %v1463 = vpop.f32.mrb[0].mxu0
        %1464 = vmatprep.mubr.bf16.mxu0 %v1242
        %1465 = vmatmul.mubr.bf16.gmra.mrb[0].mxu0 %v1241
        %v1466 = vpop.f32.mrb[0].mxu0
        %v1467 = vadd.f32 %v1302, %v1466
        %v1468 = vpop.f32.mrb[0].mxu0
        %v1469 = vpop.f32.mrb[0].mxu0
        %v1470 = vadd.f32 %v1302, %v1469
        %v1471 = vpop.f32.mrb[0].mxu0
        %1472 = vmatprep.mubr.bf16.mxu0 %v1244
        %1473 = vmatmul.mubr.bf16.gmra.mrb[0].mxu0 %v1243
        %v1474 = vpop.f32.mrb[0].mxu0
        %v1475 = vadd.f32 %v1302, %v1474
        %v1476 = vpop.f32.mrb[0].mxu0
        %v1477 = vpop.f32.mrb[0].mxu0
        %v1478 = vadd.f32 %v1302, %v1477
        %v1479 = vpop.f32.mrb[0].mxu0
        %1480 = vmatprep.mubr.bf16.mxu0 %v1246
        %1481 = vmatmul.mubr.bf16.gmra.mrb[0].mxu0 %v1245
        %v1482 = vpop.f32.mrb[0].mxu0
        %v1483 = vadd.f32 %v1302, %v1482
        %v1484 = vpop.f32.mrb[0].mxu0
        %v1485 = vpop.f32.mrb[0].mxu0
        %v1486 = vadd.f32 %v1302, %v1485
        %v1487 = vpop.f32.mrb[0].mxu0
        %1488 = vmatprep.mubr.bf16.mxu0 %v1248
        %1489 = vmatmul.mubr.bf16.gmra.mrb[0].mxu0 %v1247
        %v1490 = vpop.f32.mrb[0].mxu0
        %v1491 = vadd.f32 %v1302, %v1490
        %v1492 = vpop.f32.mrb[0].mxu0
        %v1493 = vpop.f32.mrb[0].mxu0
        %v1494 = vadd.f32 %v1302, %v1493
        %v1495 = vpop.f32.mrb[0].mxu0
        %1496 = vmatprep.mubr.bf16.mxu0 %v1250
        %1497 = vmatmul.mubr.bf16.gmra.mrb[0].mxu0 %v1249
        %v1498 = vpop.f32.mrb[0].mxu0
        %v1499 = vadd.f32 %v1302, %v1498
        %v1500 = vpop.f32.mrb[0].mxu0
        %v1501 = vpop.f32.mrb[0].mxu0
        %v1502 = vadd.f32 %v1302, %v1501
        %v1503 = vpop.f32.mrb[0].mxu0
        %1504 = vmatprep.mubr.bf16.mxu0 %v1252
        %1505 = vmatmul.mubr.bf16.gmra.mrb[0].mxu0 %v1251
        %v1506 = vpop.f32.mrb[0].mxu0
        %v1507 = vadd.f32 %v1302, %v1506
        %v1508 = vpop.f32.mrb[0].mxu0
        %v1509 = vpop.f32.mrb[0].mxu0
        %v1510 = vadd.f32 %v1302, %v1509
        %v1511 = vpop.f32.mrb[0].mxu0
        %1512 = vmatprep.mubr.bf16.mxu0 %v1254
        %1513 = vmatmul.mubr.bf16.gmra.mrb[0].mxu0 %v1253
        %v1514 = vpop.f32.mrb[0].mxu0
        %v1515 = vadd.f32 %v1302, %v1514
        %v1516 = vpop.f32.mrb[0].mxu0
        %v1517 = vpop.f32.mrb[0].mxu0
        %v1518 = vadd.f32 %v1302, %v1517
        %v1519 = vpop.f32.mrb[0].mxu0
        %1520 = vmatprep.mubr.bf16.mxu0 %v1256
        %1521 = vmatmul.mubr.bf16.gmra.mrb[0].mxu0 %v1255
        %v1522 = vpop.f32.mrb[0].mxu0
        %v1523 = vadd.f32 %v1302, %v1522
        %v1524 = vpop.f32.mrb[0].mxu0
        %v1525 = vpop.f32.mrb[0].mxu0
        %v1526 = vadd.f32 %v1302, %v1525
        %v1527 = vpop.f32.mrb[0].mxu0
        %1528 = vmatprep.mubr.bf16.mxu0 %v1258
        %1529 = vmatmul.mubr.bf16.gmra.mrb[0].mxu0 %v1257
        %v1530 = vpop.f32.mrb[0].mxu0
        %v1531 = vadd.f32 %v1302, %v1530
        %v1532 = vpop.f32.mrb[0].mxu0
        %v1533 = vpop.f32.mrb[0].mxu0
        %v1534 = vadd.f32 %v1302, %v1533
        %v1535 = vpop.f32.mrb[0].mxu0
        %1536 = vmatprep.mubr.bf16.mxu0 %v1260
        %1537 = vmatmul.mubr.bf16.gmra.mrb[0].mxu0 %v1259
        %v1538 = vpop.f32.mrb[0].mxu0
        %v1539 = vadd.f32 %v1302, %v1538
        %v1540 = vpop.f32.mrb[0].mxu0
        %v1541 = vpop.f32.mrb[0].mxu0
        %v1542 = vadd.f32 %v1302, %v1541
        %v1543 = vpop.f32.mrb[0].mxu0
        %1544 = vmatprep.mubr.bf16.mxu0 %v1262
        %1545 = vmatmul.mubr.bf16.gmra.mrb[0].mxu0 %v1261
        %v1546 = vpop.f32.mrb[0].mxu0
        %v1547 = vadd.f32 %v1302, %v1546
        %v1548 = vpop.f32.mrb[0].mxu0
        %v1549 = vpop.f32.mrb[0].mxu0
        %v1550 = vadd.f32 %v1302, %v1549
        %v1551 = vpop.f32.mrb[0].mxu0
        %1552 = vmatprep.mubr.bf16.mxu0 %v1264
        %1553 = vmatmul.mubr.bf16.gmra.mrb[0].mxu0 %v1263
        %v1554 = vpop.f32.mrb[0].mxu0
        %v1555 = vadd.f32 %v1302, %v1554
        %v1556 = vpop.f32.mrb[0].mxu0
        %v1557 = vpop.f32.mrb[0].mxu0
        %v1558 = vadd.f32 %v1302, %v1557
        %v1559 = vpop.f32.mrb[0].mxu0
        %1560 = vdwg.mxu0
        %1561 = vmax.xlane.f32.xlu0 %v1435
        %v1562 = vpop.xlane.xlu0 %1561
        %1563 = vmax.xlane.f32.xlu0 %v1438
        %v1564 = vpop.xlane.xlu0 %1563
        %1565 = vmax.xlane.f32.xlu0 %v1443
        %v1566 = vpop.xlane.xlu0 %1565
        %1567 = vmax.xlane.f32.xlu0 %v1446
        %v1568 = vpop.xlane.xlu0 %1567
        %1569 = vmax.xlane.f32.xlu0 %v1451
        %v1570 = vpop.xlane.xlu0 %1569
        %1571 = vmax.xlane.f32.xlu0 %v1454
        %v1572 = vpop.xlane.xlu0 %1571
        %1573 = vmax.xlane.f32.xlu0 %v1459
        %v1574 = vpop.xlane.xlu0 %1573
        %1575 = vmax.xlane.f32.xlu0 %v1462
        %v1576 = vpop.xlane.xlu0 %1575
        %1577 = vmax.xlane.f32.xlu0 %v1467
        %v1578 = vpop.xlane.xlu0 %1577
        %1579 = vmax.xlane.f32.xlu0 %v1470
        %v1580 = vpop.xlane.xlu0 %1579
        %1581 = vmax.xlane.f32.xlu0 %v1475
        %v1582 = vpop.xlane.xlu0 %1581
        %1583 = vmax.xlane.f32.xlu0 %v1478
        %v1584 = vpop.xlane.xlu0 %1583
        %1585 = vmax.xlane.f32.xlu0 %v1483
        %v1586 = vpop.xlane.xlu0 %1585
        %1587 = vmax.xlane.f32.xlu0 %v1486
        %v1588 = vpop.xlane.xlu0 %1587
        %1589 = vmax.xlane.f32.xlu0 %v1491
        %v1590 = vpop.xlane.xlu0 %1589
        %1591 = vmax.xlane.f32.xlu0 %v1494
        %v1592 = vpop.xlane.xlu0 %1591
        %1593 = vmax.xlane.f32.xlu0 %v1499
        %v1594 = vpop.xlane.xlu0 %1593
        %1595 = vmax.xlane.f32.xlu0 %v1502
        %v1596 = vpop.xlane.xlu0 %1595
        %1597 = vmax.xlane.f32.xlu0 %v1507
        %v1598 = vpop.xlane.xlu0 %1597
        %1599 = vmax.xlane.f32.xlu0 %v1510
        %v1600 = vpop.xlane.xlu0 %1599
        %1601 = vmax.xlane.f32.xlu0 %v1515
        %v1602 = vpop.xlane.xlu0 %1601
        %1603 = vmax.xlane.f32.xlu0 %v1518
        %v1604 = vpop.xlane.xlu0 %1603
        %1605 = vmax.xlane.f32.xlu0 %v1523
        %v1606 = vpop.xlane.xlu0 %1605
        %1607 = vmax.xlane.f32.xlu0 %v1526
        %v1608 = vpop.xlane.xlu0 %1607
        %1609 = vmax.xlane.f32.xlu0 %v1531
        %v1610 = vpop.xlane.xlu0 %1609
        %1611 = vmax.xlane.f32.xlu0 %v1534
        %v1612 = vpop.xlane.xlu0 %1611
        %1613 = vmax.xlane.f32.xlu0 %v1539
        %v1614 = vpop.xlane.xlu0 %1613
        %1615 = vmax.xlane.f32.xlu0 %v1542
        %v1616 = vpop.xlane.xlu0 %1615
        %1617 = vmax.xlane.f32.xlu0 %v1547
        %v1618 = vpop.xlane.xlu0 %1617
        %1619 = vmax.xlane.f32.xlu0 %v1550
        %v1620 = vpop.xlane.xlu0 %1619
        %1621 = vmax.xlane.f32.xlu0 %v1555
        %v1622 = vpop.xlane.xlu0 %1621
        %1623 = vmax.xlane.f32.xlu0 %v1558
        %v1624 = vpop.xlane.xlu0 %1623
        %v1625 = vsub.f32 %v1435, %v1562
        %v1626 = vsub.f32 %v1438, %v1564
        %v1627 = vsub.f32 %v1443, %v1566
        %v1628 = vsub.f32 %v1446, %v1568
        %v1629 = vsub.f32 %v1451, %v1570
        %v1630 = vsub.f32 %v1454, %v1572
        %v1631 = vsub.f32 %v1459, %v1574
        %v1632 = vsub.f32 %v1462, %v1576
        %v1633 = vsub.f32 %v1467, %v1578
        %v1634 = vsub.f32 %v1470, %v1580
        %v1635 = vsub.f32 %v1475, %v1582
        %v1636 = vsub.f32 %v1478, %v1584
        %v1637 = vsub.f32 %v1483, %v1586
        %v1638 = vsub.f32 %v1486, %v1588
        %v1639 = vsub.f32 %v1491, %v1590
        %v1640 = vsub.f32 %v1494, %v1592
        %v1641 = vsub.f32 %v1499, %v1594
        %v1642 = vsub.f32 %v1502, %v1596
        %v1643 = vsub.f32 %v1507, %v1598
        %v1644 = vsub.f32 %v1510, %v1600
        %v1645 = vsub.f32 %v1515, %v1602
        %v1646 = vsub.f32 %v1518, %v1604
        %v1647 = vsub.f32 %v1523, %v1606
        %v1648 = vsub.f32 %v1526, %v1608
        %v1649 = vsub.f32 %v1531, %v1610
        %v1650 = vsub.f32 %v1534, %v1612
        %v1651 = vsub.f32 %v1539, %v1614
        %v1652 = vsub.f32 %v1542, %v1616
        %v1653 = vsub.f32 %v1547, %v1618
        %v1654 = vsub.f32 %v1550, %v1620
        %v1655 = vsub.f32 %v1555, %v1622
        %v1656 = vsub.f32 %v1558, %v1624
        %v1657 = vmul.f32 %v1625, 1.442695
        %v1658 = vpow.pop %v1657
        %v1659 = vmul.f32 %v1626, 1.442695
        %v1660 = vpow.pop %v1659
        %v1661 = vmul.f32 %v1627, 1.442695
        %v1662 = vpow.pop %v1661
        %v1663 = vmul.f32 %v1628, 1.442695
        %v1664 = vpow.pop %v1663
        %v1665 = vmul.f32 %v1629, 1.442695
        %v1666 = vpow.pop %v1665
        %v1667 = vmul.f32 %v1630, 1.442695
        %v1668 = vpow.pop %v1667
        %v1669 = vmul.f32 %v1631, 1.442695
        %v1670 = vpow.pop %v1669
        %v1671 = vmul.f32 %v1632, 1.442695
        %v1672 = vpow.pop %v1671
        %v1673 = vmul.f32 %v1633, 1.442695
        %v1674 = vpow.pop %v1673
        %v1675 = vmul.f32 %v1634, 1.442695
        %v1676 = vpow.pop %v1675
        %v1677 = vmul.f32 %v1635, 1.442695
        %v1678 = vpow.pop %v1677
        %v1679 = vmul.f32 %v1636, 1.442695
        %v1680 = vpow.pop %v1679
        %v1681 = vmul.f32 %v1637, 1.442695
        %v1682 = vpow.pop %v1681
        %v1683 = vmul.f32 %v1638, 1.442695
        %v1684 = vpow.pop %v1683
        %v1685 = vmul.f32 %v1639, 1.442695
        %v1686 = vpow.pop %v1685
        %v1687 = vmul.f32 %v1640, 1.442695
        %v1688 = vpow.pop %v1687
        %v1689 = vmul.f32 %v1641, 1.442695
        %v1690 = vpow.pop %v1689
        %v1691 = vmul.f32 %v1642, 1.442695
        %v1692 = vpow.pop %v1691
        %v1693 = vmul.f32 %v1643, 1.442695
        %v1694 = vpow.pop %v1693
        %v1695 = vmul.f32 %v1644, 1.442695
        %v1696 = vpow.pop %v1695
        %v1697 = vmul.f32 %v1645, 1.442695
        %v1698 = vpow.pop %v1697
        %v1699 = vmul.f32 %v1646, 1.442695
        %v1700 = vpow.pop %v1699
        %v1701 = vmul.f32 %v1647, 1.442695
        %v1702 = vpow.pop %v1701
        %v1703 = vmul.f32 %v1648, 1.442695
        %v1704 = vpow.pop %v1703
        %v1705 = vmul.f32 %v1649, 1.442695
        %v1706 = vpow.pop %v1705
        %v1707 = vmul.f32 %v1650, 1.442695
        %v1708 = vpow.pop %v1707
        %v1709 = vmul.f32 %v1651, 1.442695
        %v1710 = vpow.pop %v1709
        %v1711 = vmul.f32 %v1652, 1.442695
        %v1712 = vpow.pop %v1711
        %v1713 = vmul.f32 %v1653, 1.442695
        %v1714 = vpow.pop %v1713
        %v1715 = vmul.f32 %v1654, 1.442695
        %v1716 = vpow.pop %v1715
        %v1717 = vmul.f32 %v1655, 1.442695
        %v1718 = vpow.pop %v1717
        %v1719 = vmul.f32 %v1656, 1.442695
        %v1720 = vpow.pop %v1719
        %1721 = vadd.xlane.f32.xlu0 %v1658
        %v1722 = vpop.xlane.xlu0 %1721
        %1723 = vadd.xlane.f32.xlu0 %v1660
        %v1724 = vpop.xlane.xlu0 %1723
        %1725 = vadd.xlane.f32.xlu0 %v1662
        %v1726 = vpop.xlane.xlu0 %1725
        %1727 = vadd.xlane.f32.xlu0 %v1664
        %v1728 = vpop.xlane.xlu0 %1727
        %1729 = vadd.xlane.f32.xlu0 %v1666
        %v1730 = vpop.xlane.xlu0 %1729
        %1731 = vadd.xlane.f32.xlu0 %v1668
        %v1732 = vpop.xlane.xlu0 %1731
        %1733 = vadd.xlane.f32.xlu0 %v1670
        %v1734 = vpop.xlane.xlu0 %1733
        %1735 = vadd.xlane.f32.xlu0 %v1672
        %v1736 = vpop.xlane.xlu0 %1735
        %1737 = vadd.xlane.f32.xlu0 %v1674
        %v1738 = vpop.xlane.xlu0 %1737
        %1739 = vadd.xlane.f32.xlu0 %v1676
        %v1740 = vpop.xlane.xlu0 %1739
        %1741 = vadd.xlane.f32.xlu0 %v1678
        %v1742 = vpop.xlane.xlu0 %1741
        %1743 = vadd.xlane.f32.xlu0 %v1680
        %v1744 = vpop.xlane.xlu0 %1743
        %1745 = vadd.xlane.f32.xlu0 %v1682
        %v1746 = vpop.xlane.xlu0 %1745
        %1747 = vadd.xlane.f32.xlu0 %v1684
        %v1748 = vpop.xlane.xlu0 %1747
        %1749 = vadd.xlane.f32.xlu0 %v1686
        %v1750 = vpop.xlane.xlu0 %1749
        %1751 = vadd.xlane.f32.xlu0 %v1688
        %v1752 = vpop.xlane.xlu0 %1751
        %1753 = vadd.xlane.f32.xlu0 %v1690
        %v1754 = vpop.xlane.xlu0 %1753
        %1755 = vadd.xlane.f32.xlu0 %v1692
        %v1756 = vpop.xlane.xlu0 %1755
        %1757 = vadd.xlane.f32.xlu0 %v1694
        %v1758 = vpop.xlane.xlu0 %1757
        %1759 = vadd.xlane.f32.xlu0 %v1696
        %v1760 = vpop.xlane.xlu0 %1759
        %1761 = vadd.xlane.f32.xlu0 %v1698
        %v1762 = vpop.xlane.xlu0 %1761
        %1763 = vadd.xlane.f32.xlu0 %v1700
        %v1764 = vpop.xlane.xlu0 %1763
        %1765 = vadd.xlane.f32.xlu0 %v1702
        %v1766 = vpop.xlane.xlu0 %1765
        %1767 = vadd.xlane.f32.xlu0 %v1704
        %v1768 = vpop.xlane.xlu0 %1767
        %1769 = vadd.xlane.f32.xlu0 %v1706
        %v1770 = vpop.xlane.xlu0 %1769
        %1771 = vadd.xlane.f32.xlu0 %v1708
        %v1772 = vpop.xlane.xlu0 %1771
        %1773 = vadd.xlane.f32.xlu0 %v1710
        %v1774 = vpop.xlane.xlu0 %1773
        %1775 = vadd.xlane.f32.xlu0 %v1712
        %v1776 = vpop.xlane.xlu0 %1775
        %1777 = vadd.xlane.f32.xlu0 %v1714
        %v1778 = vpop.xlane.xlu0 %1777
        %1779 = vadd.xlane.f32.xlu0 %v1716
        %v1780 = vpop.xlane.xlu0 %1779
        %1781 = vadd.xlane.f32.xlu0 %v1718
        %v1782 = vpop.xlane.xlu0 %1781
        %1783 = vadd.xlane.f32.xlu0 %v1720
        %v1784 = vpop.xlane.xlu0 %1783
        %v1785 = vrcp.pop %v1722
        %v1786 = vrcp.pop %v1724
        %v1787 = vrcp.pop %v1726
        %v1788 = vrcp.pop %v1728
        %v1789 = vrcp.pop %v1730
        %v1790 = vrcp.pop %v1732
        %v1791 = vrcp.pop %v1734
        %v1792 = vrcp.pop %v1736
        %v1793 = vrcp.pop %v1738
        %v1794 = vrcp.pop %v1740
        %v1795 = vrcp.pop %v1742
        %v1796 = vrcp.pop %v1744
        %v1797 = vrcp.pop %v1746
        %v1798 = vrcp.pop %v1748
        %v1799 = vrcp.pop %v1750
        %v1800 = vrcp.pop %v1752
        %v1801 = vrcp.pop %v1754
        %v1802 = vrcp.pop %v1756
        %v1803 = vrcp.pop %v1758
        %v1804 = vrcp.pop %v1760
        %v1805 = vrcp.pop %v1762
        %v1806 = vrcp.pop %v1764
        %v1807 = vrcp.pop %v1766
        %v1808 = vrcp.pop %v1768
        %v1809 = vrcp.pop %v1770
        %v1810 = vrcp.pop %v1772
        %v1811 = vrcp.pop %v1774
        %v1812 = vrcp.pop %v1776
        %v1813 = vrcp.pop %v1778
        %v1814 = vrcp.pop %v1780
        %v1815 = vrcp.pop %v1782
        %v1816 = vrcp.pop %v1784
        %v1817 = vmul.f32 %v1658, %v1785
        %v1818 = vmul.f32 %v1660, %v1786
        %v1819 = vmul.f32 %v1662, %v1787
        %v1820 = vmul.f32 %v1664, %v1788
        %v1821 = vmul.f32 %v1666, %v1789
        %v1822 = vmul.f32 %v1668, %v1790
        %v1823 = vmul.f32 %v1670, %v1791
        %v1824 = vmul.f32 %v1672, %v1792
        %v1825 = vmul.f32 %v1674, %v1793
        %v1826 = vmul.f32 %v1676, %v1794
        %v1827 = vmul.f32 %v1678, %v1795
        %v1828 = vmul.f32 %v1680, %v1796
        %v1829 = vmul.f32 %v1682, %v1797
        %v1830 = vmul.f32 %v1684, %v1798
        %v1831 = vmul.f32 %v1686, %v1799
        %v1832 = vmul.f32 %v1688, %v1800
        %v1833 = vmul.f32 %v1690, %v1801
        %v1834 = vmul.f32 %v1692, %v1802
        %v1835 = vmul.f32 %v1694, %v1803
        %v1836 = vmul.f32 %v1696, %v1804
        %v1837 = vmul.f32 %v1698, %v1805
        %v1838 = vmul.f32 %v1700, %v1806
        %v1839 = vmul.f32 %v1702, %v1807
        %v1840 = vmul.f32 %v1704, %v1808
        %v1841 = vmul.f32 %v1706, %v1809
        %v1842 = vmul.f32 %v1708, %v1810
        %v1843 = vmul.f32 %v1710, %v1811
        %v1844 = vmul.f32 %v1712, %v1812
        %v1845 = vmul.f32 %v1714, %v1813
        %v1846 = vmul.f32 %v1716, %v1814
        %v1847 = vmul.f32 %v1718, %v1815
        %v1848 = vmul.f32 %v1720, %v1816
        %v1849 = vpack.c.bf16 %v1818, %v1817
        %v1850 = vpack.c.bf16 %v1820, %v1819
        %v1851 = vpack.c.bf16 %v1822, %v1821
        %v1852 = vpack.c.bf16 %v1824, %v1823
        %v1853 = vpack.c.bf16 %v1826, %v1825
        %v1854 = vpack.c.bf16 %v1828, %v1827
        %v1855 = vpack.c.bf16 %v1830, %v1829
        %v1856 = vpack.c.bf16 %v1832, %v1831
        %v1857 = vpack.c.bf16 %v1834, %v1833
        %v1858 = vpack.c.bf16 %v1836, %v1835
        %v1859 = vpack.c.bf16 %v1838, %v1837
        %v1860 = vpack.c.bf16 %v1840, %v1839
        %v1861 = vpack.c.bf16 %v1842, %v1841
        %v1862 = vpack.c.bf16 %v1844, %v1843
        %v1863 = vpack.c.bf16 %v1846, %v1845
        %v1864 = vpack.c.bf16 %v1848, %v1847
        %v1881 = vunpack.c.l.b16 %v1849
        %v1882 = vunpack.c.h.b16 %v1849
        %v1883 = vunpack.c.l.b16 %v1850
        %v1884 = vunpack.c.h.b16 %v1850
        %v1885 = vunpack.c.l.b16 %v1851
        %v1886 = vunpack.c.h.b16 %v1851
        %v1887 = vunpack.c.l.b16 %v1852
        %v1888 = vunpack.c.h.b16 %v1852
        %v1889 = vunpack.c.l.b16 %v1853
        %v1890 = vunpack.c.h.b16 %v1853
        %v1891 = vunpack.c.l.b16 %v1854
        %v1892 = vunpack.c.h.b16 %v1854
        %v1893 = vunpack.c.l.b16 %v1855
        %v1894 = vunpack.c.h.b16 %v1855
        %v1895 = vunpack.c.l.b16 %v1856
        %v1896 = vunpack.c.h.b16 %v1856
        %v1897 = vunpack.c.l.b16 %v1857
        %v1898 = vunpack.c.h.b16 %v1857
        %v1899 = vunpack.c.l.b16 %v1858
        %v1900 = vunpack.c.h.b16 %v1858
        %v1901 = vunpack.c.l.b16 %v1859
        %v1902 = vunpack.c.h.b16 %v1859
        %v1903 = vunpack.c.l.b16 %v1860
        %v1904 = vunpack.c.h.b16 %v1860
        %v1905 = vunpack.c.l.b16 %v1861
        %v1906 = vunpack.c.h.b16 %v1861
        %v1907 = vunpack.c.l.b16 %v1862
        %v1908 = vunpack.c.h.b16 %v1862
        %v1909 = vunpack.c.l.b16 %v1863
        %v1910 = vunpack.c.h.b16 %v1863
        %v1911 = vunpack.c.l.b16 %v1864
        %v1912 = vunpack.c.h.b16 %v1864
        %v1913 = vpack.c.b16 %v1881, %v1881
        %v1914 = vpack.c.b16 %v1882, %v1882
        %v1915 = vpack.c.b16 %v1883, %v1883
        %v1916 = vpack.c.b16 %v1884, %v1884
        %v1917 = vpack.c.b16 %v1885, %v1885
        %v1918 = vpack.c.b16 %v1886, %v1886
        %v1919 = vpack.c.b16 %v1887, %v1887
        %v1920 = vpack.c.b16 %v1888, %v1888
        %v1921 = vpack.c.b16 %v1889, %v1889
        %v1922 = vpack.c.b16 %v1890, %v1890
        %v1923 = vpack.c.b16 %v1891, %v1891
        %v1924 = vpack.c.b16 %v1892, %v1892
        %v1925 = vpack.c.b16 %v1893, %v1893
        %v1926 = vpack.c.b16 %v1894, %v1894
        %v1927 = vpack.c.b16 %v1895, %v1895
        %v1928 = vpack.c.b16 %v1896, %v1896
        %v1929 = vpack.c.b16 %v1897, %v1897
        %v1930 = vpack.c.b16 %v1898, %v1898
        %v1931 = vpack.c.b16 %v1899, %v1899
        %v1932 = vpack.c.b16 %v1900, %v1900
        %v1933 = vpack.c.b16 %v1901, %v1901
        %v1934 = vpack.c.b16 %v1902, %v1902
        %v1935 = vpack.c.b16 %v1903, %v1903
        %v1936 = vpack.c.b16 %v1904, %v1904
        %v1937 = vpack.c.b16 %v1905, %v1905
        %v1938 = vpack.c.b16 %v1906, %v1906
        %v1939 = vpack.c.b16 %v1907, %v1907
        %v1940 = vpack.c.b16 %v1908, %v1908
        %v1941 = vpack.c.b16 %v1909, %v1909
        %v1942 = vpack.c.b16 %v1910, %v1910
        %v1943 = vpack.c.b16 %v1911, %v1911
        %v1944 = vpack.c.b16 %v1912, %v1912
        %1977 = vst [vmem:[%s295] sm:$0xf] %v1913
        %1978 = vst [vmem:[%s295 + $0x4] sm:$0xf] %v1914
        %1979 = vst [vmem:[%s295 + $0x8] sm:$0xf] %v1915
        %1980 = vst [vmem:[%s295 + $0xc] sm:$0xf] %v1916
        %1981 = vst [vmem:[%s295 + $0x10] sm:$0xf] %v1917
        %1982 = vst [vmem:[%s295 + $0x14] sm:$0xf] %v1918
        %1983 = vst [vmem:[%s295 + $0x18] sm:$0xf] %v1919
        %1984 = vst [vmem:[%s295 + $0x1c] sm:$0xf] %v1920
        %1985 = vst [vmem:[%s295 + $0x20] sm:$0xf] %v1921
        %1986 = vst [vmem:[%s295 + $0x24] sm:$0xf] %v1922
        %1987 = vst [vmem:[%s295 + $0x28] sm:$0xf] %v1923
        %1988 = vst [vmem:[%s295 + $0x2c] sm:$0xf] %v1924
        %1989 = vst [vmem:[%s295 + $0x30] sm:$0xf] %v1925
        %1990 = vst [vmem:[%s295 + $0x34] sm:$0xf] %v1926
        %1991 = vst [vmem:[%s295 + $0x38] sm:$0xf] %v1927
        %1992 = vst [vmem:[%s295 + $0x3c] sm:$0xf] %v1928
        %1993 = vst [vmem:[%s295 + $0x40] sm:$0xf] %v1929
        %1994 = vst [vmem:[%s295 + $0x44] sm:$0xf] %v1930
        %1995 = vst [vmem:[%s295 + $0x48] sm:$0xf] %v1931
        %1996 = vst [vmem:[%s295 + $0x4c] sm:$0xf] %v1932
        %1997 = vst [vmem:[%s295 + $0x50] sm:$0xf] %v1933
        %1998 = vst [vmem:[%s295 + $0x54] sm:$0xf] %v1934
        %1999 = vst [vmem:[%s295 + $0x58] sm:$0xf] %v1935
        %2000 = vst [vmem:[%s295 + $0x5c] sm:$0xf] %v1936
        %2001 = vst [vmem:[%s295 + $0x60] sm:$0xf] %v1937
        %2002 = vst [vmem:[%s295 + $0x64] sm:$0xf] %v1938
        %2003 = vst [vmem:[%s295 + $0x68] sm:$0xf] %v1939
        %2004 = vst [vmem:[%s295 + $0x6c] sm:$0xf] %v1940
        %2005 = vst [vmem:[%s295 + $0x70] sm:$0xf] %v1941
        %2006 = vst [vmem:[%s295 + $0x74] sm:$0xf] %v1942
        %2007 = vst [vmem:[%s295 + $0x78] sm:$0xf] %v1943
        %2008 = vst [vmem:[%s295 + $0x7c] sm:$0xf] %v1944
        %s2009 = smul.u32 32, %s19
        %p2010 = scmp.lt.s32.totalorder %s2009, 63
        %s2011 = scalar_select %p2010, %s2009, 63
        %s2012 = smul.addr %s2011, 4
        %s2013 = scalar_lea.vmem %s7, %s2012
        // Predicated region
        $region53: #{_actor_forward.1} parent=47 // pred_check
          %p2014 = pneg %p189
        $region54: #{_actor_forward.1} parent=47 // pred_check_branch
          %2016 = sbr.rel (%p2014) target = $region56
        $region55: #{_actor_forward.1} parent=47 // pred_region
          %s2017 = smul.u32 32, %s19
        $region56: #{_actor_forward.1} parent=47 // pred_fallthru
          _
      $region48: #{_actor_forward.1} parent=5 // pred_fallthru
        _
      %p2018 = scmp.le.s32.totalorder 2, %s14
      // Predicated region
      $region57: #{_actor_forward.1} parent=5 // pred_check
        %p2019 = pneg %p2018
      $region58: #{_actor_forward.1} parent=5 // pred_check_branch
        %2021 = sbr.rel (%p2019) target = $region60
      $region59: #{_actor_forward.1} parent=5 // pred_region
        %s2022 = ssub.s32 %s14, 2
        // Predicated region
        $region61: #{_actor_forward.1} parent=59 // pred_check
          %p2023 = pneg %p195
        $region62: #{_actor_forward.1} parent=59 // pred_check_branch
          %2025 = sbr.rel (%p2023) target = $region64
        $region63: #{_actor_forward.1} parent=59 // pred_region
          %s2026 = smul.u32 32, %s20
          %p2027 = scmp.lt.s32.totalorder %s2026, 63
          %s2028 = scalar_select %p2027, %s2026, 63
          %s2029 = smul.addr %s2028, 4
          %s2030 = scalar_lea.vmem %s7, %s2029
        $region64: #{_actor_forward.1} parent=59 // pred_fallthru
          _
      $region60: #{_actor_forward.1} parent=5 // pred_fallthru
        _
    $region6: #{_actor_forward.1} parent=1 // loop_footer
      %s18 = sadd.s32 1, %s14
    $region7: #{_actor_forward.1} parent=1 // loop_footer_branch
      %13 = sbr.rel target = $region3
    $region8: #{_actor_forward.1} parent=1 // loop_exit
      _
    %2031 = vsyncpa [#allocation3], 1
    %s2032 = scalar_lea.sflag [#allocation3], 1
    %2033 = vsyncpa %s2032, 1

</llo_original>
